<compile_context>
chip_gen: v6e
topology: v6e:2x2x1
jax: 0.10.0
libtpu: 0.0.40
codegen_flags: <defaults>
</compile_context>

<pallas_src>
import functools
import warnings

import jax
import jax.numpy as jnp
from jax.experimental import pallas as pl
from jax.experimental.pallas import tpu as pltpu


_TILED_VMEM_LIMIT = 32 * 1024 * 1024


# ----------------------------------------------------------------------------
# Hardware-aware sizing.
# ----------------------------------------------------------------------------
@functools.lru_cache(maxsize=None)
def _vmem_capacity_bytes():
    try:
        return int(pltpu.get_tpu_info().vmem_capacity_bytes)
    except Exception:
        return 64 * 1024 * 1024          # conservative (v7x-sized) fallback


def _fused_vmem_config():
    """(budget, vmem_limit) for the single-pass fused path."""
    if _vmem_capacity_bytes() >= 128 * 1024 * 1024:     # v5e / v6e: 128 MiB per TC
        return 80 * 1024 * 1024, 110 * 1024 * 1024
    return 24 * 1024 * 1024, 48 * 1024 * 1024           # v7x: 64 MiB physical


def _tile_target_bytes():
    # v7x (3.2 TB/s HBM, 64 MiB VMEM): bigger tiles amortize the ~0.35us/step cost.
    return 2 * 1024 * 1024 if _vmem_capacity_bytes() >= 128 * 1024 * 1024 \
        else 4 * 1024 * 1024


def _pick_spatial_tile(c, s, itemsize, target_bytes):
    """Lane-dense spatial tile: multiple of 128, never larger than S."""
    if s <= 128:
        return int(s)                    # single tile == full extent
    lanes = max(128, (target_bytes // max(c * itemsize, 1)) // 128 * 128)
    return int(min(lanes, (s // 128) * 128))


# ----------------------------------------------------------------------------
# Fused single-pass path (small volumes): pooling + MLP + apply in one kernel.
# ----------------------------------------------------------------------------
def _fused_kernel(x_ref, w1_ref, w2_ref, o_ref, *, inv_s):
    # x_ref / o_ref: (C, S) one batch element (leading batch dim squeezed).
    # w1_ref: (Cr, C), w2_ref: (C, Cr)   (1x1x1 convs == dense matrices).
    x = x_ref[...]                                                    # native dtype

    # f32 only in the (C, 1) pooled statistics, not a full-slab copy.
    ssum = jnp.sum(x, axis=-1, keepdims=True, dtype=jnp.float32)      # (C, 1)
    avg = ssum * inv_s
    mx = jnp.max(x, axis=-1, keepdims=True).astype(jnp.float32)       # (C, 1)

    # Stack avg/max into one (C, 2) operand -> 2 MXU dots instead of 4.
    lane = jax.lax.broadcasted_iota(jnp.int32, (1, 2), 1)
    p = jnp.where(lane == 0, avg, mx)                                 # (C, 2)
    h = jnp.maximum(
        jnp.dot(w1_ref[...], p, preferred_element_type=jnp.float32), 0.0)   # (Cr, 2)
    att2 = jnp.dot(w2_ref[...], h, preferred_element_type=jnp.float32)       # (C, 2)
    att = jnp.sum(att2, axis=-1, keepdims=True)                       # (C, 1)

    att1 = jax.nn.sigmoid(att) + 1.0                                  # residual folded in
    o_ref[...] = (att1.astype(x.dtype) * x).astype(o_ref.dtype)


def _fused_forward_impl(x, w1, w2, *, vmem_limit, alias_out):
    n, c, d, h, w = x.shape
    s = d * h * w
    cr = w1.shape[0]
    itemsize = x.dtype.itemsize
    x_flat = x.reshape(n, c, s)

    out_flat = pl.pallas_call(
        functools.partial(_fused_kernel, inv_s=1.0 / float(s)),
        out_shape=jax.ShapeDtypeStruct((n, c, s), x.dtype),
        grid=(n,),
        in_specs=[
            pl.BlockSpec((None, c, s), lambda i: (i, 0, 0)),
            pl.BlockSpec((cr, c), lambda i: (0, 0)),
            pl.BlockSpec((c, cr), lambda i: (0, 0)),
        ],
        out_specs=pl.BlockSpec((None, c, s), lambda i: (i, 0, 0)),
        input_output_aliases=({0: 0} if alias_out else {}),
        compiler_params=pltpu.CompilerParams(
            dimension_semantics=("parallel",),
            vmem_limit_bytes=vmem_limit),
        cost_estimate=pl.CostEstimate(
            flops=4 * n * c * s + 8 * n * c * cr,
            transcendentals=n * c,
            bytes_accessed=2 * n * c * s * itemsize),
    )(x_flat, w1, w2)
    return out_flat.reshape(n, c, d, h, w)


_fused_forward = jax.jit(
    _fused_forward_impl, static_argnames=("vmem_limit", "alias_out"))
_fused_forward_donate = jax.jit(
    _fused_forward_impl, static_argnames=("vmem_limit", "alias_out"),
    donate_argnums=(0,))


# ----------------------------------------------------------------------------
# Tiled two-pass path (large volumes): pool kernel -> JAX MLP -> apply kernel.
# ----------------------------------------------------------------------------
def _pool_kernel(x_ref, sum_ref, max_ref, sum_acc, max_acc, *,
                 s, num_tiles, tiles_per_split):
    # x_ref: (C, ts) spatial tile of one batch element; outputs: (C, 1) per split.
    p = pl.program_id(1)                 # core-split index
    j = pl.program_id(2)                 # tile index within this split
    ts = x_ref.shape[-1]
    g = p * tiles_per_split + j          # global (un-clamped) spatial tile index

    @pl.when(j == 0)
    def _():
        sum_acc[...] = jnp.zeros_like(sum_acc)
        max_acc[...] = jnp.full_like(max_acc, -jnp.inf)

    x = x_ref[...]

    # Interior tiles: fully in-bounds, no masking.
    @pl.when(g < num_tiles - 1)
    def _():
        sum_acc[...] += jnp.sum(x, axis=-1, keepdims=True, dtype=jnp.float32)
        max_acc[...] = jnp.maximum(
            max_acc[...], jnp.max(x, axis=-1, keepdims=True).astype(jnp.float32))

    # Last real tile (possibly partial) and any fully-out-of-range tiles produced
    # by the core split: mask BOTH the sum (0) and the max (-inf).
    @pl.when(g >= num_tiles - 1)
    def _():
        col = jax.lax.broadcasted_iota(jnp.int32, (1, ts), 1) + g * ts
        valid = col < s
        xf = x.astype(jnp.float32)
        sum_acc[...] += jnp.sum(jnp.where(valid, xf, 0.0),
                                axis=-1, keepdims=True)
        max_acc[...] = jnp.maximum(
            max_acc[...],
            jnp.max(jnp.where(valid, xf, -jnp.inf), axis=-1, keepdims=True))

    @pl.when(j == pl.num_programs(2) - 1)
    def _():
        sum_ref[...] = sum_acc[...]
        max_ref[...] = max_acc[...]


def _apply_kernel(att_ref, x_ref, o_ref):
    # att_ref: (N, C, 1) whole array, resident in VMEM (fetched once).
    # x_ref / o_ref: (C, ts) lane-dense tile.  att already includes the residual.
    i = pl.program_id(0)
    x = x_ref[...]
    o_ref[...] = (att_ref[i].astype(x.dtype) * x).astype(o_ref.dtype)


def _tiled_forward_impl(x, w1, w2, *, ts, core_split, vmem_limit, alias_out):
    n, c, d, h, w = x.shape
    s = d * h * w
    itemsize = x.dtype.itemsize
    x_flat = x.reshape(n, c, s)

    num_tiles = pl.cdiv(s, ts)
    ncs = 2 if core_split else 1                     # core-split factor (v7x megacore)
    tiles_per_split = pl.cdiv(num_tiles, ncs)

    def x_index(i, p, j):
        g = p * tiles_per_split + j
        # Clamp so reads always stay in-bounds; overflow tiles are masked in-kernel.
        return (i, 0, jnp.minimum(g, num_tiles - 1))

    # Pass 1: per-split partial sum / max over the spatial axis (un-padded).
    pooled_sum, pooled_max = pl.pallas_call(
        functools.partial(_pool_kernel, s=s, num_tiles=num_tiles,
                          tiles_per_split=tiles_per_split),
        out_shape=(jax.ShapeDtypeStruct((n, ncs, c, 1), jnp.float32),
                   jax.ShapeDtypeStruct((n, ncs, c, 1), jnp.float32)),
        grid=(n, ncs, tiles_per_split),
        in_specs=[pl.BlockSpec((None, c, ts), x_index)],
        out_specs=(pl.BlockSpec((None, None, c, 1), lambda i, p, j: (i, p, 0, 0)),
                   pl.BlockSpec((None, None, c, 1), lambda i, p, j: (i, p, 0, 0))),
        scratch_shapes=[pltpu.VMEM((c, 1), jnp.float32),
                        pltpu.VMEM((c, 1), jnp.float32)],
        compiler_params=pltpu.CompilerParams(
            dimension_semantics=("parallel", "parallel", "arbitrary"),
            vmem_limit_bytes=vmem_limit),
        cost_estimate=pl.CostEstimate(
            flops=2 * n * c * s, transcendentals=0,
            bytes_accessed=n * c * s * itemsize + 2 * n * ncs * c * 4),
    )(x_flat)

    # Tiny channel MLP + sigmoid in plain JAX.  fc2 is linear, so it distributes
    # over the sum of the two relu branches.  Residual folded in (+1).
    avg = jnp.sum(pooled_sum, axis=1)[..., 0] * (1.0 / float(s))      # (N, C)
    mx = jnp.max(pooled_max, axis=1)[..., 0]                          # (N, C)
    h_sum = jnp.maximum(avg @ w1.T, 0.0) + jnp.maximum(mx @ w1.T, 0.0)
    att1 = (jax.nn.sigmoid(h_sum @ w2.T) + 1.0).astype(jnp.float32)[:, :, None]

    # Pass 2: out = att1 * x on lane-dense (C, ts) tiles; att1 is VMEM-resident.
    out_flat = pl.pallas_call(
        _apply_kernel,
        out_shape=jax.ShapeDtypeStruct((n, c, s), x.dtype),
        grid=(n, num_tiles),
        in_specs=[pl.BlockSpec((n, c, 1), lambda i, j: (0, 0, 0)),
                  pl.BlockSpec((None, c, ts), lambda i, j: (i, 0, j))],
        out_specs=pl.BlockSpec((None, c, ts), lambda i, j: (i, 0, j)),
        input_output_aliases=({1: 0} if alias_out else {}),
        compiler_params=pltpu.CompilerParams(
            dimension_semantics=("parallel", "parallel"),
            vmem_limit_bytes=vmem_limit),
        cost_estimate=pl.CostEstimate(
            flops=n * c * s, transcendentals=0,
            bytes_accessed=2 * n * c * s * itemsize + n * c * 4),
    )(att1, x_flat)

    return out_flat.reshape(n, c, d, h, w)


_tiled_forward = jax.jit(
    _tiled_forward_impl,
    static_argnames=("ts", "core_split", "vmem_limit", "alias_out"))
_tiled_forward_donate = jax.jit(
    _tiled_forward_impl,
    static_argnames=("ts", "core_split", "vmem_limit", "alias_out"),
    donate_argnums=(0,))


# ----------------------------------------------------------------------------
# Public wrapper: size-aware path selection.
# ----------------------------------------------------------------------------
def channel_attention_3d(x, w1, w2, *, donate_x=False,
                         fused_vmem_budget=None, tile_bytes=None):
    """x: (N, C, D, H, W); w1: (C//r, C); w2: (C, C//r).  Returns sigmoid(att)*x + x.

    donate_x=True lets the output alias (and overwrite) x's HBM buffer in place;
    only set it when the caller no longer needs x.
    """
    n, c, d, h, w = x.shape
    s = d * h * w
    itemsize = x.dtype.itemsize

    budget, fused_limit = _fused_vmem_config()
    if fused_vmem_budget is None:
        fused_vmem_budget = budget
    if tile_bytes is None:
        tile_bytes = _tile_target_bytes()

    # Fused path holds one (C, S) slab of x and of out, double-buffered; for
    # sub-f32 dtypes also budget a possible f32 temporary inside the reduction.
    fused_bytes = 4 * c * s * itemsize + (c * s * 4 if itemsize < 4 else 0)
    if fused_bytes <= fused_vmem_budget:
        fn = _fused_forward_donate if donate_x else _fused_forward
        return fn(x, w1, w2, vmem_limit=fused_limit, alias_out=donate_x)

    ts = _pick_spatial_tile(c, s, itemsize, tile_bytes)
    num_tiles = pl.cdiv(s, ts)
    # 2-way split of the spatial reduction so a 2-TC chip (v7x) is fully used for
    # single-batch inference; harmless (tiny) on 1-TC parts.
    core_split = (n == 1 and num_tiles >= 2)
    fn = _tiled_forward_donate if donate_x else _tiled_forward
    return fn(x, w1, w2, ts=ts, core_split=core_split,
              vmem_limit=_TILED_VMEM_LIMIT, alias_out=donate_x)


# ----------------------------------------------------------------------------
# Pure-JAX reference mirroring the PyTorch forward.
# ----------------------------------------------------------------------------
def _reference(x, w1, w2):
    xf = x.astype(jnp.float32)
    avg = jnp.mean(xf, axis=(2, 3, 4))                 # (N, C)
    mx = jnp.max(xf, axis=(2, 3, 4))                   # (N, C)

    def mlp(p):                                        # p: (N, C)
        return jnp.maximum(p @ w1.T, 0.0) @ w2.T       # (N, C)

    att = jax.nn.sigmoid(mlp(avg) + mlp(mx))[:, :, None, None, None]
    return att * xf + xf


if __name__ == "__main__":
    # Remove matmul-precision ambiguity between the plain-JAX reference and the
    # in-kernel MXU dots, and silence benign donation notices.
    jax.config.update("jax_default_matmul_precision", "highest")
    warnings.filterwarnings("ignore", message=".*donated.*")

    key = jax.random.PRNGKey(0)
    k_x, k_w1, k_w2, k_x2 = jax.random.split(key, 4)

    # Shapes consistent with the module: in_channels=32, reduction=16 -> hidden=2.
    N, C, D, H, W = 2, 32, 4, 8, 8
    reduction = 16
    Cr = C // reduction

    x = jax.random.normal(k_x, (N, C, D, H, W), dtype=jnp.float32)
    w1 = jax.random.normal(k_w1, (Cr, C), dtype=jnp.float32) * (1.0 / jnp.sqrt(C))
    w2 = jax.random.normal(k_w2, (C, Cr), dtype=jnp.float32) * (1.0 / jnp.sqrt(Cr))

    ref = _reference(x, w1, w2)

    # 1) Small volume -> fused single-pass kernel.
    out_fused = jax.block_until_ready(channel_attention_3d(x, w1, w2))
    assert out_fused.shape == x.shape
    assert jnp.allclose(out_fused, ref, atol=1e-4, rtol=1e-4), (
        float(jnp.max(jnp.abs(out_fused - ref))))

    # 2) Force the tiled two-pass path (N=2 -> no core split, 2 tiles per batch).
    out_tiled = jax.block_until_ready(
        channel_attention_3d(x, w1, w2, fused_vmem_budget=-1, tile_bytes=128 * C * 4))
    assert jnp.allclose(out_tiled, ref, atol=1e-4, rtol=1e-4), (
        float(jnp.max(jnp.abs(out_tiled - ref))))

    # 3) Tiled path, N=1 (exercises the 2-way core split) with a non-128-aligned
    #    spatial size (exercises the masked partial edge tile, no padding pass).
    x2 = jax.random.normal(k_x2, (1, C, 3, 7, 9), dtype=jnp.float32)
    ref2 = jax.block_until_ready(_reference(x2, w1, w2))
    out2 = jax.block_until_ready(
        channel_attention_3d(x2, w1, w2, fused_vmem_budget=-1, tile_bytes=128 * C * 4))
    assert jnp.allclose(out2, ref2, atol=1e-4, rtol=1e-4), (
        float(jnp.max(jnp.abs(out2 - ref2))))

    # 4) Tiled path with input donation (output aliases x's buffer in place).
    x3 = x2 + 0.0
    out3 = jax.block_until_ready(
        channel_attention_3d(x3, w1, w2, donate_x=True,
                             fused_vmem_budget=-1, tile_bytes=128 * C * 4))
    assert jnp.allclose(out3, ref2, atol=1e-4, rtol=1e-4), (
        float(jnp.max(jnp.abs(out3 - ref2))))

    # 5) Fused path with input donation.
    x4 = x + 0.0
    out4 = jax.block_until_ready(channel_attention_3d(x4, w1, w2, donate_x=True))
    assert jnp.allclose(out4, ref, atol=1e-4, rtol=1e-4), (
        float(jnp.max(jnp.abs(out4 - ref))))

    # 6) bf16 input on the fused path (native-dtype apply, f32 pooled stats).
    xb = x.astype(jnp.bfloat16)
    refb = _reference(xb, w1, w2)
    outb = jax.block_until_ready(channel_attention_3d(xb, w1, w2))
    assert outb.dtype == jnp.bfloat16
    assert jnp.allclose(outb.astype(jnp.float32), refb, atol=1e-1, rtol=1e-1), (
        float(jnp.max(jnp.abs(outb.astype(jnp.float32) - refb))))

    print("KERNEL_OK")
</pallas_src>

<mosaic_0001>
module attributes {stable_mosaic.version = 11 : i64} {
  func.func @_fused_kernel(%arg0: i32, %arg1: memref<1x32x256xf32, #tpu.memory_space<vmem>>, %arg2: memref<2x32xf32, #tpu.memory_space<vmem>>, %arg3: memref<32x2xf32, #tpu.memory_space<vmem>>, %arg4: memref<1x32x256xf32, #tpu.memory_space<vmem>>) attributes {dimension_semantics = [#tpu.dimension_semantics<parallel>], iteration_bounds = array<i64: 2>, scalar_prefetch = 0 : i64, scratch_operands = 0 : i64, tpu.core_type = #tpu.core_type<tc>, window_params = [{transform_indices = @transform_0, window_bounds = array<i64: 1, 32, 256>}, {pipeline_mode = #tpu.pipeline_mode<synchronous>, transform_indices = @transform_1, window_bounds = array<i64: 2, 32>}, {pipeline_mode = #tpu.pipeline_mode<synchronous>, transform_indices = @transform_2, window_bounds = array<i64: 32, 2>}, {transform_indices = @transform_3, window_bounds = array<i64: 1, 32, 256>}]} {
    %c0 = arith.constant 0 : index
    %c0_0 = arith.constant 0 : index
    %c0_1 = arith.constant 0 : index
    %0 = vector.load %arg1[%c0, %c0_0, %c0_1] : memref<1x32x256xf32, #tpu.memory_space<vmem>>, vector<1x32x256xf32>
    %1 = vector.shape_cast %0 : vector<1x32x256xf32> to vector<32x256xf32>
    %cst = arith.constant dense<0.000000e+00> : vector<32xf32>
    %2 = vector.multi_reduction <add>, %1, %cst [1] : vector<32x256xf32> to vector<32xf32>
    %3 = vector.shape_cast %2 : vector<32xf32> to vector<32x1xf32>
    %cst_2 = arith.constant 3.906250e-03 : f32
    %4 = vector.broadcast %cst_2 : f32 to vector<32x1xf32>
    %5 = arith.mulf %3, %4 : vector<32x1xf32>
    %cst_3 = arith.constant dense<0xFF800000> : vector<32xf32>
    %6 = vector.multi_reduction <maximumf>, %1, %cst_3 [1] : vector<32x256xf32> to vector<32xf32>
    %7 = vector.shape_cast %6 : vector<32xf32> to vector<32x1xf32>
    %8 = tpu.iota {dimensions = array<i32: 1>} : vector<1x2xi32>
    %c0_i32 = arith.constant 0 : i32
    %9 = vector.broadcast %c0_i32 : i32 to vector<1x2xi32>
    %10 = arith.cmpi eq, %8, %9 : vector<1x2xi32>
    %11 = vector.shape_cast %10 : vector<1x2xi1> to vector<1x2xi1>
    %12 = vector.broadcast %11 : vector<1x2xi1> to vector<32x2xi1>
    %13 = vector.shape_cast %5 : vector<32x1xf32> to vector<32x1xf32>
    %14 = vector.broadcast %13 : vector<32x1xf32> to vector<32x2xf32>
    %15 = vector.shape_cast %7 : vector<32x1xf32> to vector<32x1xf32>
    %16 = vector.broadcast %15 : vector<32x1xf32> to vector<32x2xf32>
    %17 = arith.select %12, %14, %16 : vector<32x2xi1>, vector<32x2xf32>
    %c0_4 = arith.constant 0 : index
    %c0_5 = arith.constant 0 : index
    %18 = vector.load %arg2[%c0_4, %c0_5] : memref<2x32xf32, #tpu.memory_space<vmem>>, vector<2x32xf32>
    %cst_6 = arith.constant dense<0.000000e+00> : vector<2x2xf32>
    %19 = tpu.matmul %18, %17, %cst_6 {dimension_numbers = #tpu.dot_dimension_numbers<[1], [0], [0], [1], [0, 0, 1, 1], [], []>, precision = #tpu.contract_precision<fp32>} : vector<2x32xf32>, vector<32x2xf32>, vector<2x2xf32> -> vector<2x2xf32>
    %cst_7 = arith.constant 0.000000e+00 : f32
    %20 = vector.broadcast %cst_7 : f32 to vector<2x2xf32>
    %21 = arith.maximumf %19, %20 : vector<2x2xf32>
    %c0_8 = arith.constant 0 : index
    %c0_9 = arith.constant 0 : index
    %22 = vector.load %arg3[%c0_8, %c0_9] : memref<32x2xf32, #tpu.memory_space<vmem>>, vector<32x2xf32>
    %cst_10 = arith.constant dense<0.000000e+00> : vector<32x2xf32>
    %23 = tpu.matmul %22, %21, %cst_10 {dimension_numbers = #tpu.dot_dimension_numbers<[1], [0], [0], [1], [0, 0, 1, 1], [], []>, precision = #tpu.contract_precision<fp32>} : vector<32x2xf32>, vector<2x2xf32>, vector<32x2xf32> -> vector<32x2xf32>
    %cst_11 = arith.constant dense<0.000000e+00> : vector<32xf32>
    %24 = vector.multi_reduction <add>, %23, %cst_11 [1] : vector<32x2xf32> to vector<32xf32>
    %25 = vector.shape_cast %24 : vector<32xf32> to vector<32x1xf32>
    %26 = arith.negf %25 : vector<32x1xf32>
    %27 = math.exp %26 : vector<32x1xf32>
    %cst_12 = arith.constant 1.000000e+00 : f32
    %28 = vector.broadcast %cst_12 : f32 to vector<32x1xf32>
    %29 = arith.addf %28, %27 : vector<32x1xf32>
    %30 = arith.divf %28, %29 : vector<32x1xf32>
    %cst_13 = arith.constant 1.000000e+00 : f32
    %31 = vector.broadcast %cst_13 : f32 to vector<32x1xf32>
    %32 = arith.addf %30, %31 : vector<32x1xf32>
    %33 = vector.broadcast %32 : vector<32x1xf32> to vector<32x256xf32>
    %34 = arith.mulf %33, %1 : vector<32x256xf32>
    %c0_14 = arith.constant 0 : index
    %c0_15 = arith.constant 0 : index
    %c0_16 = arith.constant 0 : index
    %35 = vector.load %arg4[%c0_14, %c0_15, %c0_16] : memref<1x32x256xf32, #tpu.memory_space<vmem>>, vector<1x32x256xf32>
    %36 = vector.shape_cast %35 : vector<1x32x256xf32> to vector<32x256xf32>
    %37 = vector.shape_cast %34 : vector<32x256xf32> to vector<1x32x256xf32>
    tpu.vector_store %arg4[%c0_14, %c0_15, %c0_16], %37 {strides = array<i32>} : memref<1x32x256xf32, #tpu.memory_space<vmem>>, vector<1x32x256xf32>,
    return
  }
  func.func @transform_0(%arg0: i32) -> (i32, i32, i32) {
    %c0_i32 = arith.constant 0 : i32
    %c0_i32_0 = arith.constant 0 : i32
    %c0_i32_1 = arith.constant 0 : i32
    return %arg0, %c0_i32, %c0_i32_0 : i32, i32, i32
  }
  func.func @transform_1(%arg0: i32) -> (i32, i32) {
    %c0_i32 = arith.constant 0 : i32
    %c0_i32_0 = arith.constant 0 : i32
    %c0_i32_1 = arith.constant 0 : i32
    return %c0_i32, %c0_i32_0 : i32, i32
  }
  func.func @transform_2(%arg0: i32) -> (i32, i32) {
    %c0_i32 = arith.constant 0 : i32
    %c0_i32_0 = arith.constant 0 : i32
    %c0_i32_1 = arith.constant 0 : i32
    return %c0_i32, %c0_i32_0 : i32, i32
  }
  func.func @transform_3(%arg0: i32) -> (i32, i32, i32) {
    %c0_i32 = arith.constant 0 : i32
    %c0_i32_0 = arith.constant 0 : i32
    %c0_i32_1 = arith.constant 0 : i32
    return %arg0, %c0_i32, %c0_i32_0 : i32, i32, i32
  }
}

</mosaic_0001>

<llo_original>
// kernel: _fused_forward_impl.1
$region0: #{_fused_forward_impl.1}
  #allocation0 [shape = 'u32[]', space=smem, size = 0x4, offset = 0x4, fixed_abs, tag = 'smem constant byte address 0x4 - core index']
  #allocation1 [shape = 'u32[144,128]{1,0:T(1,128)}', space=vmem, size = 0x12000, scoped, tag = 'internal scratch']
  %s0 = inlined_call_operand.vmem [shape: f32[2,32,256], index: 0, kind: input, shape index: {}]
  %s1 = inlined_call_operand.vmem [shape: f32[2,32], index: 1, kind: input, shape index: {}]
  %s2 = inlined_call_operand.vmem [shape: f32[32,2], index: 2, kind: input, shape index: {}]
  %s3 = inlined_call_operand.vmem [shape: f32[2,32,256], index: 3, kind: output, shape index: {}]
  %s4 = sld [smem:[#allocation0]]
  $region45: #{_fused_forward_impl.1} parent=0
    _
  %s6 = ssub.s32 1, %s4
  %s7 = scalar_select 0, %s6, %s4
  loop: start=0, step=1, limit=4
  $region2: #{_fused_forward_impl.1} parent=0 // loop_pre_header
    _
  $region3: #{_fused_forward_impl.1} parent=0 // loop_header
    %s9 = sphi 0, %s13
    %p10 = scmp.ge.s32.totalorder %s9, 4
    %s19 = sphi 0, %s21
    %s22 = sphi 0, %s19
    %s23 = sphi 0, %s22
    %s39 = sphi 0, %s23
    %s43 = sphi 0, %s43
    %s45 = sphi 0, %s43
    %s46 = sphi 0, %s45
    %s60 = sphi 0, %s46
    %s64 = sphi 0, %s64
    %s66 = sphi 0, %s64
    %s67 = sphi 0, %s66
    %s81 = sphi 0, %s67
    %s87 = sphi 0, %s89
    %s90 = sphi 0, %s87
    %s91 = sphi 0, %s90
    %s107 = sphi 0, %s91
  $region4: #{_fused_forward_impl.1} parent=0 // loop_header_branch
    %12 = sbr.rel (%p10) target = $region8
  $region5: #{_fused_forward_impl.1} parent=0 // loop_body
    %s14 = ssub.s32 %s9, 1
    %s15 = ssub.s32 %s9, 2
    %s16 = sadd.s32 %s9, 1
    %s17 = ssub.s32 %s9, %s16
    %p18 = scmp.eq.s32.totalorder %s17, 0
    %s20 = sadd.s32 %s19, 1
    %s21 = scalar_select %p18, %s19, %s20
    %p24 = pneg %p18
    %p25 = scmp.eq.s32.totalorder %s9, 1
    %p26 = por %p24, %p25
    %p27 = scmp.ne.s32.totalorder %s19, %s22
    %p28 = scmp.eq.s32.totalorder %s9, 0
    %p29 = por %p27, %p28
    %p30 = scmp.ne.s32.totalorder %s19, %s22
    %p31 = scmp.eq.s32.totalorder %s14, 1
    %p32 = por %p30, %p31
    %p33 = scmp.ne.s32.totalorder %s22, %s23
    %p34 = scmp.eq.s32.totalorder %s14, 0
    %p35 = por %p33, %p34
    %p36 = scmp.ne.s32.totalorder %s22, %s23
    %p37 = scmp.eq.s32.totalorder %s15, 1
    %p38 = por %p36, %p37
    %p40 = scmp.ne.s32.totalorder %s23, %s39
    %p41 = scmp.eq.s32.totalorder %s15, 0
    %p42 = por %p40, %p41
    %s44 = sadd.s32 %s43, 1
    %p47 = scmp.eq.s32.totalorder %s9, 1
    %p48 = scmp.ne.s32.totalorder %s43, %s45
    %p49 = scmp.eq.s32.totalorder %s9, 0
    %p50 = por %p48, %p49
    %p51 = scmp.ne.s32.totalorder %s43, %s45
    %p52 = scmp.eq.s32.totalorder %s14, 1
    %p53 = por %p51, %p52
    %p54 = scmp.ne.s32.totalorder %s45, %s46
    %p55 = scmp.eq.s32.totalorder %s14, 0
    %p56 = por %p54, %p55
    %p57 = scmp.ne.s32.totalorder %s45, %s46
    %p58 = scmp.eq.s32.totalorder %s15, 1
    %p59 = por %p57, %p58
    %p61 = scmp.ne.s32.totalorder %s46, %s60
    %p62 = scmp.eq.s32.totalorder %s15, 0
    %p63 = por %p61, %p62
    %s65 = sadd.s32 %s64, 1
    %p68 = scmp.eq.s32.totalorder %s9, 1
    %p69 = scmp.ne.s32.totalorder %s64, %s66
    %p70 = scmp.eq.s32.totalorder %s9, 0
    %p71 = por %p69, %p70
    %p72 = scmp.ne.s32.totalorder %s64, %s66
    %p73 = scmp.eq.s32.totalorder %s14, 1
    %p74 = por %p72, %p73
    %p75 = scmp.ne.s32.totalorder %s66, %s67
    %p76 = scmp.eq.s32.totalorder %s14, 0
    %p77 = por %p75, %p76
    %p78 = scmp.ne.s32.totalorder %s66, %s67
    %p79 = scmp.eq.s32.totalorder %s15, 1
    %p80 = por %p78, %p79
    %p82 = scmp.ne.s32.totalorder %s67, %s81
    %p83 = scmp.eq.s32.totalorder %s15, 0
    %p84 = por %p82, %p83
    %s85 = ssub.s32 %s9, %s16
    %p86 = scmp.eq.s32.totalorder %s85, 0
    %s88 = sadd.s32 %s87, 1
    %s89 = scalar_select %p86, %s87, %s88
    %p92 = pneg %p86
    %p93 = scmp.eq.s32.totalorder %s9, 1
    %p94 = por %p92, %p93
    %p95 = scmp.ne.s32.totalorder %s87, %s90
    %p96 = scmp.eq.s32.totalorder %s9, 0
    %p97 = por %p95, %p96
    %p98 = scmp.ne.s32.totalorder %s87, %s90
    %p99 = scmp.eq.s32.totalorder %s14, 1
    %p100 = por %p98, %p99
    %p101 = scmp.ne.s32.totalorder %s90, %s91
    %p102 = scmp.eq.s32.totalorder %s14, 0
    %p103 = por %p101, %p102
    %p104 = scmp.ne.s32.totalorder %s90, %s91
    %p105 = scmp.eq.s32.totalorder %s15, 1
    %p106 = por %p104, %p105
    %p108 = scmp.ne.s32.totalorder %s91, %s107
    %p109 = scmp.eq.s32.totalorder %s15, 0
    %p110 = por %p108, %p109
    %p111 = scmp.le.s32.totalorder 1, %s9
    %p112 = scmp.lt.s32.totalorder %s9, 3
    %p113 = pnand %p111, %p112
    %p114 = pneg %p113
    // Predicated region
    $region9: #{_fused_forward_impl.1} parent=5 // pred_check
      _
    $region10: #{_fused_forward_impl.1} parent=5 // pred_check_branch
      %116 = sbr.rel (%p113) target = $region12
    $region11: #{_fused_forward_impl.1} parent=5 // pred_region
      %s117 = ssub.s32 %s9, 1
      // Predicated region
      $region13: #{_fused_forward_impl.1} parent=11 // pred_check
        %p118 = pneg %p56
      $region14: #{_fused_forward_impl.1} parent=11 // pred_check_branch
        %120 = sbr.rel (%p118) target = $region16
      $region15: #{_fused_forward_impl.1} parent=11 // pred_region
        _
      $region16: #{_fused_forward_impl.1} parent=11 // pred_fallthru
        _
      // Predicated region
      $region17: #{_fused_forward_impl.1} parent=11 // pred_check
        %p121 = pneg %p77
      $region18: #{_fused_forward_impl.1} parent=11 // pred_check_branch
        %123 = sbr.rel (%p121) target = $region20
      $region19: #{_fused_forward_impl.1} parent=11 // pred_region
        _
      $region20: #{_fused_forward_impl.1} parent=11 // pred_fallthru
        _
    $region12: #{_fused_forward_impl.1} parent=5 // pred_fallthru
      _
    %p124 = scmp.lt.s32.totalorder %s9, 2
    // Predicated region
    $region21: #{_fused_forward_impl.1} parent=5 // pred_check
      %p125 = pneg %p124
    $region22: #{_fused_forward_impl.1} parent=5 // pred_check_branch
      %127 = sbr.rel (%p125) target = $region24
    $region23: #{_fused_forward_impl.1} parent=5 // pred_region
      // Predicated region
      $region25: #{_fused_forward_impl.1} parent=23 // pred_check
        %p128 = pneg %p29
      $region26: #{_fused_forward_impl.1} parent=23 // pred_check_branch
        %130 = sbr.rel (%p128) target = $region28
      $region27: #{_fused_forward_impl.1} parent=23 // pred_region
        %p131 = scmp.lt.s32.totalorder %s9, 1
        %s132 = scalar_select %p131, %s9, 1
        %s133 = smul.addr %s132, 8
        %s134 = smul.addr %s133, 8
        %s135 = scalar_lea.vmem %s0, %s134
      $region28: #{_fused_forward_impl.1} parent=23 // pred_fallthru
        _
    $region24: #{_fused_forward_impl.1} parent=5 // pred_fallthru
      _
    %p136 = scmp.le.s32.totalorder 1, %s9
    %p137 = scmp.lt.s32.totalorder %s9, 3
    %p138 = pnand %p136, %p137
    %p139 = pneg %p138
    // Predicated region
    $region29: #{_fused_forward_impl.1} parent=5 // pred_check
      _
    $region30: #{_fused_forward_impl.1} parent=5 // pred_check_branch
      %141 = sbr.rel (%p138) target = $region32
    $region31: #{_fused_forward_impl.1} parent=5 // pred_region
      %s142 = ssub.s32 %s9, 1
      %p143 = scmp.lt.s32.totalorder %s14, 1
      %s144 = scalar_select %p143, %s14, 1
      %s145 = smul.addr %s144, 8
      %s146 = smul.addr %s145, 8
      %s147 = scalar_lea.vmem %s0, %s146
      %p148 = pneg %p35
      %p149 = pneg %p32
      %p150 = pneg %p56
      %p151 = pneg %p53
      %p152 = pneg %p77
      %p153 = pneg %p74
      %p154 = pneg %p103
      %p155 = pneg %p100
      %p156 = scmp.lt.s32.totalorder %s14, 1
      %s157 = scalar_select %p156, %s14, 1
      %s158 = smul.addr %s157, 8
      %s159 = smul.addr %s158, 8
      %s160 = scalar_lea.vmem %s3, %s159
      %p161 = scmp.lt.s32.totalorder %s14, 1
      %s162 = scalar_select %p161, %s14, 1
      %s163 = smul.addr %s162, 8
      %s164 = smul.addr %s163, 8
      %s165 = scalar_lea.vmem %s0, %s164
      %p166 = scmp.lt.s32.totalorder %s14, 1
      %s167 = scalar_select %p166, %s14, 1
      %s168 = smul.addr %s167, 8
      %s169 = smul.addr %s168, 8
      %s170 = scalar_lea.vmem %s3, %s169
      %v171 = vld [vmem:[%s165] sm:$0xff]
      %v172 = vld [vmem:[%s165 + $0x8] sm:$0xff]
      %v173 = vld [vmem:[%s165 + $0x10] sm:$0xff]
      %v174 = vld [vmem:[%s165 + $0x18] sm:$0xff]
      %v175 = vld [vmem:[%s165 + $0x20] sm:$0xff]
      %v176 = vld [vmem:[%s165 + $0x28] sm:$0xff]
      %v177 = vld [vmem:[%s165 + $0x30] sm:$0xff]
      %v178 = vld [vmem:[%s165 + $0x38] sm:$0xff]
      %v179 = vadd.f32 %v171, %v172
      %180 = vadd.xlane.f32.xlu0 %v179
      %v181 = vpop.xlane.xlu0 %180
      %v182 = vadd.f32 %v173, %v174
      %183 = vadd.xlane.f32.xlu0 %v182
      %v184 = vpop.xlane.xlu0 %183
      %v185 = vadd.f32 %v175, %v176
      %186 = vadd.xlane.f32.xlu0 %v185
      %v187 = vpop.xlane.xlu0 %186
      %v188 = vadd.f32 %v177, %v178
      %189 = vadd.xlane.f32.xlu0 %v188
      %v190 = vpop.xlane.xlu0 %189
      %v191 = vmul.f32 %v181, 0.00390625
      %v192 = vmul.f32 %v184, 0.00390625
      %v193 = vmul.f32 %v187, 0.00390625
      %v194 = vmul.f32 %v190, 0.00390625
      %v195 = vmax.f32 %v171, %v172
      %196 = vmax.xlane.f32.xlu0 %v195
      %v197 = vpop.xlane.xlu0 %196
      %v198 = vmax.f32 %v173, %v174
      %199 = vmax.xlane.f32.xlu0 %v198
      %v200 = vpop.xlane.xlu0 %199
      %v201 = vmax.f32 %v175, %v176
      %202 = vmax.xlane.f32.xlu0 %v201
      %v203 = vpop.xlane.xlu0 %202
      %v204 = vmax.f32 %v177, %v178
      %205 = vmax.xlane.f32.xlu0 %v204
      %v206 = vpop.xlane.xlu0 %205
      %v207 = vlaneseq
      %v208 = vand.u32 %v207, 127
      %vm209 = vcmp.eq.s32.totalorder %v208, 0
      %v210 = vsel %vm209, 1, 0
      %vm211 = vcmp.eq.s32.totalorder %v210, 1
      %v212 = vsel %vm211, %v191, %v197
      %v213 = vsel %vm211, %v192, %v200
      %v214 = vsel %vm211, %v193, %v203
      %v215 = vsel %vm211, %v194, %v206
      %v216 = vld [vmem:[%s1] sm:$0x3]
      %vm217 = vcmask 261120
      %v219 = vsel %vm217, %v216, 0
      %221 = vmatprep.subr.mxu0 0.0
      %222 = vmatpush1.msra.mxu0 0.0
      %223 = vmatprep.subr.mxu0 0.0
      %224 = vmatpush1.msra.mxu0 0.0
      %225 = vmatprep.subr.mxu0 0.0
      %226 = vmatpush1.msra.mxu0 0.0
      %227 = vmatprep.subr.mxu0 0.0
      %228 = vmatpush1.msra.mxu0 0.0
      %229 = vmatprep.subr.mxu0 0.0
      %230 = vmatpush1.msra.mxu0 0.0
      %231 = vmatprep.subr.mxu0 0.0
      %232 = vmatpush1.msra.mxu0 0.0
      %233 = vmatprep.subr.mxu0 0.0
      %234 = vmatpush1.msra.mxu0 0.0
      %235 = vmatprep.subr.mxu0 0.0
      %236 = vmatpush1.msra.mxu0 0.0
      %237 = vmatprep.subr.mxu0 0.0
      %238 = vmatpush1.msra.mxu0 0.0
      %239 = vmatprep.subr.mxu0 0.0
      %240 = vmatpush1.msra.mxu0 0.0
      %241 = vmatprep.subr.mxu0 0.0
      %242 = vmatpush1.msra.mxu0 0.0
      %243 = vmatprep.subr.mxu0 0.0
      %244 = vmatpush1.msra.mxu0 0.0
      %245 = vmatprep.subr.mxu0 0.0
      %v246 = vand.u32 %v215, 4294901760
      %247 = vmatpush1.msra.mxu0 %v246
      %248 = vmatprep.subr.mxu0 0.0
      %v249 = vand.u32 %v214, 4294901760
      %250 = vmatpush1.msra.mxu0 %v249
      %251 = vmatprep.subr.mxu0 0.0
      %v252 = vand.u32 %v213, 4294901760
      %253 = vmatpush1.msra.mxu0 %v252
      %254 = vmatprep.subr.mxu0 0.0
      %v255 = vand.u32 %v212, 4294901760
      %256 = vmatpush1.msra.mxu0 %v255
      %257 = vmatprep.subr.mxu0 0.0
      %258 = vmatpush2.msra.mxu0 0.0
      %259 = vmatprep.subr.mxu0 0.0
      %260 = vmatpush2.msra.mxu0 0.0
      %261 = vmatprep.subr.mxu0 0.0
      %262 = vmatpush2.msra.mxu0 0.0
      %263 = vmatprep.subr.mxu0 0.0
      %264 = vmatpush2.msra.mxu0 0.0
      %265 = vmatprep.subr.mxu0 0.0
      %266 = vmatpush2.msra.mxu0 0.0
      %267 = vmatprep.subr.mxu0 0.0
      %268 = vmatpush2.msra.mxu0 0.0
      %269 = vmatprep.subr.mxu0 0.0
      %270 = vmatpush2.msra.mxu0 0.0
      %271 = vmatprep.subr.mxu0 0.0
      %272 = vmatpush2.msra.mxu0 0.0
      %273 = vmatprep.subr.mxu0 0.0
      %274 = vmatpush2.msra.mxu0 0.0
      %275 = vmatprep.subr.mxu0 0.0
      %276 = vmatpush2.msra.mxu0 0.0
      %277 = vmatprep.subr.mxu0 0.0
      %278 = vmatpush2.msra.mxu0 0.0
      %279 = vmatprep.subr.mxu0 0.0
      %280 = vmatpush2.msra.mxu0 0.0
      %281 = vmatprep.subr.mxu0 0.0
      %282 = vmatpush2.msra.mxu0 0.0
      %283 = vmatprep.subr.mxu0 0.0
      %284 = vmatpush2.msra.mxu0 0.0
      %285 = vmatprep.subr.mxu0 0.0
      %286 = vmatpush2.msra.mxu0 0.0
      %287 = vmatprep.subr.mxu0 0.0
      %288 = vmatpush2.msra.mxu0 0.0
      %289 = vmatprep.mubr.f32.mxu0 0.0
      %v290 = vand.u32 %v219, 4294901760
      %v291 = vsub.f32 %v219, %v290
      %v292 = vand.u32 %v291, 4294901760
      %v293 = vsub.f32 %v291, %v292
      %v294 = vand.u32 %v293, 4294901760
      %295 = vmatmul.mubr.f32.gmra.mxu0 %v294
      %v296 = vpop.f32.mrf.mxu0
      %v297 = vadd.f32 0.0, %v296
      %v298 = vpop.f32.mrf.mxu0
      %299 = vdwg.mxu0
      %300 = vmatprep.subr.mxu0 0.0
      %301 = vmatpush1.msra.mxu0 0.0
      %302 = vmatprep.subr.mxu0 0.0
      %303 = vmatpush1.msra.mxu0 0.0
      %304 = vmatprep.subr.mxu0 0.0
      %305 = vmatpush1.msra.mxu0 0.0
      %306 = vmatprep.subr.mxu0 0.0
      %307 = vmatpush1.msra.mxu0 0.0
      %308 = vmatprep.subr.mxu0 0.0
      %309 = vmatpush1.msra.mxu0 0.0
      %310 = vmatprep.subr.mxu0 0.0
      %311 = vmatpush1.msra.mxu0 0.0
      %312 = vmatprep.subr.mxu0 0.0
      %313 = vmatpush1.msra.mxu0 0.0
      %314 = vmatprep.subr.mxu0 0.0
      %315 = vmatpush1.msra.mxu0 0.0
      %316 = vmatprep.subr.mxu0 0.0
      %317 = vmatpush1.msra.mxu0 0.0
      %318 = vmatprep.subr.mxu0 0.0
      %319 = vmatpush1.msra.mxu0 0.0
      %320 = vmatprep.subr.mxu0 0.0
      %321 = vmatpush1.msra.mxu0 0.0
      %322 = vmatprep.subr.mxu0 0.0
      %323 = vmatpush1.msra.mxu0 0.0
      %324 = vmatprep.subr.mxu0 0.0
      %v325 = vand.u32 %v215, 4294901760
      %v326 = vsub.f32 %v215, %v325
      %v327 = vand.u32 %v326, 4294901760
      %v328 = vsub.f32 %v326, %v327
      %v329 = vand.u32 %v328, 4294901760
      %330 = vmatpush1.msra.mxu0 %v329
      %331 = vmatprep.subr.mxu0 0.0
      %v332 = vand.u32 %v214, 4294901760
      %v333 = vsub.f32 %v214, %v332
      %v334 = vand.u32 %v333, 4294901760
      %v335 = vsub.f32 %v333, %v334
      %v336 = vand.u32 %v335, 4294901760
      %337 = vmatpush1.msra.mxu0 %v336
      %338 = vmatprep.subr.mxu0 0.0
      %v339 = vand.u32 %v213, 4294901760
      %v340 = vsub.f32 %v213, %v339
      %v341 = vand.u32 %v340, 4294901760
      %v342 = vsub.f32 %v340, %v341
      %v343 = vand.u32 %v342, 4294901760
      %344 = vmatpush1.msra.mxu0 %v343
      %345 = vmatprep.subr.mxu0 0.0
      %v346 = vand.u32 %v212, 4294901760
      %v347 = vsub.f32 %v212, %v346
      %v348 = vand.u32 %v347, 4294901760
      %v349 = vsub.f32 %v347, %v348
      %v350 = vand.u32 %v349, 4294901760
      %351 = vmatpush1.msra.mxu0 %v350
      %352 = vmatprep.subr.mxu0 0.0
      %353 = vmatpush2.msra.mxu0 0.0
      %354 = vmatprep.subr.mxu0 0.0
      %355 = vmatpush2.msra.mxu0 0.0
      %356 = vmatprep.subr.mxu0 0.0
      %357 = vmatpush2.msra.mxu0 0.0
      %358 = vmatprep.subr.mxu0 0.0
      %359 = vmatpush2.msra.mxu0 0.0
      %360 = vmatprep.subr.mxu0 0.0
      %361 = vmatpush2.msra.mxu0 0.0
      %362 = vmatprep.subr.mxu0 0.0
      %363 = vmatpush2.msra.mxu0 0.0
      %364 = vmatprep.subr.mxu0 0.0
      %365 = vmatpush2.msra.mxu0 0.0
      %366 = vmatprep.subr.mxu0 0.0
      %367 = vmatpush2.msra.mxu0 0.0
      %368 = vmatprep.subr.mxu0 0.0
      %369 = vmatpush2.msra.mxu0 0.0
      %370 = vmatprep.subr.mxu0 0.0
      %371 = vmatpush2.msra.mxu0 0.0
      %372 = vmatprep.subr.mxu0 0.0
      %373 = vmatpush2.msra.mxu0 0.0
      %374 = vmatprep.subr.mxu0 0.0
      %375 = vmatpush2.msra.mxu0 0.0
      %376 = vmatprep.subr.mxu0 0.0
      %377 = vmatpush2.msra.mxu0 0.0
      %378 = vmatprep.subr.mxu0 0.0
      %379 = vmatpush2.msra.mxu0 0.0
      %380 = vmatprep.subr.mxu0 0.0
      %381 = vmatpush2.msra.mxu0 0.0
      %382 = vmatprep.subr.mxu0 0.0
      %383 = vmatpush2.msra.mxu0 0.0
      %384 = vmatprep.mubr.f32.mxu0 0.0
      %v385 = vand.u32 %v219, 4294901760
      %386 = vmatmul.mubr.f32.gmra.mxu0 %v385
      %v387 = vpop.f32.mrf.mxu0
      %v388 = vadd.f32 %v297, %v387
      %v389 = vpop.f32.mrf.mxu0
      %390 = vdwg.mxu0
      %391 = vmatprep.subr.mxu0 0.0
      %392 = vmatpush1.msra.mxu0 0.0
      %393 = vmatprep.subr.mxu0 0.0
      %394 = vmatpush1.msra.mxu0 0.0
      %395 = vmatprep.subr.mxu0 0.0
      %396 = vmatpush1.msra.mxu0 0.0
      %397 = vmatprep.subr.mxu0 0.0
      %398 = vmatpush1.msra.mxu0 0.0
      %399 = vmatprep.subr.mxu0 0.0
      %400 = vmatpush1.msra.mxu0 0.0
      %401 = vmatprep.subr.mxu0 0.0
      %402 = vmatpush1.msra.mxu0 0.0
      %403 = vmatprep.subr.mxu0 0.0
      %404 = vmatpush1.msra.mxu0 0.0
      %405 = vmatprep.subr.mxu0 0.0
      %406 = vmatpush1.msra.mxu0 0.0
      %407 = vmatprep.subr.mxu0 0.0
      %408 = vmatpush1.msra.mxu0 0.0
      %409 = vmatprep.subr.mxu0 0.0
      %410 = vmatpush1.msra.mxu0 0.0
      %411 = vmatprep.subr.mxu0 0.0
      %412 = vmatpush1.msra.mxu0 0.0
      %413 = vmatprep.subr.mxu0 0.0
      %414 = vmatpush1.msra.mxu0 0.0
      %415 = vmatprep.subr.mxu0 0.0
      %v416 = vand.u32 %v215, 4294901760
      %v417 = vsub.f32 %v215, %v416
      %418 = vmatpush1.msra.mxu0 %v417
      %419 = vmatprep.subr.mxu0 0.0
      %v420 = vand.u32 %v214, 4294901760
      %v421 = vsub.f32 %v214, %v420
      %422 = vmatpush1.msra.mxu0 %v421
      %423 = vmatprep.subr.mxu0 0.0
      %v424 = vand.u32 %v213, 4294901760
      %v425 = vsub.f32 %v213, %v424
      %426 = vmatpush1.msra.mxu0 %v425
      %427 = vmatprep.subr.mxu0 0.0
      %v428 = vand.u32 %v212, 4294901760
      %v429 = vsub.f32 %v212, %v428
      %430 = vmatpush1.msra.mxu0 %v429
      %431 = vmatprep.subr.mxu0 0.0
      %432 = vmatpush2.msra.mxu0 0.0
      %433 = vmatprep.subr.mxu0 0.0
      %434 = vmatpush2.msra.mxu0 0.0
      %435 = vmatprep.subr.mxu0 0.0
      %436 = vmatpush2.msra.mxu0 0.0
      %437 = vmatprep.subr.mxu0 0.0
      %438 = vmatpush2.msra.mxu0 0.0
      %439 = vmatprep.subr.mxu0 0.0
      %440 = vmatpush2.msra.mxu0 0.0
      %441 = vmatprep.subr.mxu0 0.0
      %442 = vmatpush2.msra.mxu0 0.0
      %443 = vmatprep.subr.mxu0 0.0
      %444 = vmatpush2.msra.mxu0 0.0
      %445 = vmatprep.subr.mxu0 0.0
      %446 = vmatpush2.msra.mxu0 0.0
      %447 = vmatprep.subr.mxu0 0.0
      %448 = vmatpush2.msra.mxu0 0.0
      %449 = vmatprep.subr.mxu0 0.0
      %450 = vmatpush2.msra.mxu0 0.0
      %451 = vmatprep.subr.mxu0 0.0
      %452 = vmatpush2.msra.mxu0 0.0
      %453 = vmatprep.subr.mxu0 0.0
      %454 = vmatpush2.msra.mxu0 0.0
      %455 = vmatprep.subr.mxu0 0.0
      %456 = vmatpush2.msra.mxu0 0.0
      %457 = vmatprep.subr.mxu0 0.0
      %458 = vmatpush2.msra.mxu0 0.0
      %459 = vmatprep.subr.mxu0 0.0
      %460 = vmatpush2.msra.mxu0 0.0
      %461 = vmatprep.subr.mxu0 0.0
      %462 = vmatpush2.msra.mxu0 0.0
      %463 = vmatprep.mubr.f32.mxu0 0.0
      %v464 = vand.u32 %v219, 4294901760
      %v465 = vsub.f32 %v219, %v464
      %466 = vmatmul.mubr.f32.gmra.mxu0 %v465
      %v467 = vpop.f32.mrf.mxu0
      %v468 = vadd.f32 %v388, %v467
      %v469 = vpop.f32.mrf.mxu0
      %470 = vdwg.mxu0
      %471 = vmatprep.subr.mxu0 0.0
      %472 = vmatpush1.msra.mxu0 0.0
      %473 = vmatprep.subr.mxu0 0.0
      %474 = vmatpush1.msra.mxu0 0.0
      %475 = vmatprep.subr.mxu0 0.0
      %476 = vmatpush1.msra.mxu0 0.0
      %477 = vmatprep.subr.mxu0 0.0
      %478 = vmatpush1.msra.mxu0 0.0
      %479 = vmatprep.subr.mxu0 0.0
      %480 = vmatpush1.msra.mxu0 0.0
      %481 = vmatprep.subr.mxu0 0.0
      %482 = vmatpush1.msra.mxu0 0.0
      %483 = vmatprep.subr.mxu0 0.0
      %484 = vmatpush1.msra.mxu0 0.0
      %485 = vmatprep.subr.mxu0 0.0
      %486 = vmatpush1.msra.mxu0 0.0
      %487 = vmatprep.subr.mxu0 0.0
      %488 = vmatpush1.msra.mxu0 0.0
      %489 = vmatprep.subr.mxu0 0.0
      %490 = vmatpush1.msra.mxu0 0.0
      %491 = vmatprep.subr.mxu0 0.0
      %492 = vmatpush1.msra.mxu0 0.0
      %493 = vmatprep.subr.mxu0 0.0
      %494 = vmatpush1.msra.mxu0 0.0
      %495 = vmatprep.subr.mxu0 0.0
      %v496 = vand.u32 %v215, 4294901760
      %497 = vmatpush1.msra.mxu0 %v496
      %498 = vmatprep.subr.mxu0 0.0
      %v499 = vand.u32 %v214, 4294901760
      %500 = vmatpush1.msra.mxu0 %v499
      %501 = vmatprep.subr.mxu0 0.0
      %v502 = vand.u32 %v213, 4294901760
      %503 = vmatpush1.msra.mxu0 %v502
      %504 = vmatprep.subr.mxu0 0.0
      %v505 = vand.u32 %v212, 4294901760
      %506 = vmatpush1.msra.mxu0 %v505
      %507 = vmatprep.subr.mxu0 0.0
      %508 = vmatpush2.msra.mxu0 0.0
      %509 = vmatprep.subr.mxu0 0.0
      %510 = vmatpush2.msra.mxu0 0.0
      %511 = vmatprep.subr.mxu0 0.0
      %512 = vmatpush2.msra.mxu0 0.0
      %513 = vmatprep.subr.mxu0 0.0
      %514 = vmatpush2.msra.mxu0 0.0
      %515 = vmatprep.subr.mxu0 0.0
      %516 = vmatpush2.msra.mxu0 0.0
      %517 = vmatprep.subr.mxu0 0.0
      %518 = vmatpush2.msra.mxu0 0.0
      %519 = vmatprep.subr.mxu0 0.0
      %520 = vmatpush2.msra.mxu0 0.0
      %521 = vmatprep.subr.mxu0 0.0
      %522 = vmatpush2.msra.mxu0 0.0
      %523 = vmatprep.subr.mxu0 0.0
      %524 = vmatpush2.msra.mxu0 0.0
      %525 = vmatprep.subr.mxu0 0.0
      %526 = vmatpush2.msra.mxu0 0.0
      %527 = vmatprep.subr.mxu0 0.0
      %528 = vmatpush2.msra.mxu0 0.0
      %529 = vmatprep.subr.mxu0 0.0
      %530 = vmatpush2.msra.mxu0 0.0
      %531 = vmatprep.subr.mxu0 0.0
      %532 = vmatpush2.msra.mxu0 0.0
      %533 = vmatprep.subr.mxu0 0.0
      %534 = vmatpush2.msra.mxu0 0.0
      %535 = vmatprep.subr.mxu0 0.0
      %536 = vmatpush2.msra.mxu0 0.0
      %537 = vmatprep.subr.mxu0 0.0
      %538 = vmatpush2.msra.mxu0 0.0
      %539 = vmatprep.mubr.f32.mxu0 0.0
      %v540 = vand.u32 %v219, 4294901760
      %v541 = vsub.f32 %v219, %v540
      %v542 = vand.u32 %v541, 4294901760
      %543 = vmatmul.mubr.f32.gmra.mxu0 %v542
      %v544 = vpop.f32.mrf.mxu0
      %v545 = vadd.f32 %v468, %v544
      %v546 = vpop.f32.mrf.mxu0
      %547 = vdwg.mxu0
      %548 = vmatprep.subr.mxu0 0.0
      %549 = vmatpush1.msra.mxu0 0.0
      %550 = vmatprep.subr.mxu0 0.0
      %551 = vmatpush1.msra.mxu0 0.0
      %552 = vmatprep.subr.mxu0 0.0
      %553 = vmatpush1.msra.mxu0 0.0
      %554 = vmatprep.subr.mxu0 0.0
      %555 = vmatpush1.msra.mxu0 0.0
      %556 = vmatprep.subr.mxu0 0.0
      %557 = vmatpush1.msra.mxu0 0.0
      %558 = vmatprep.subr.mxu0 0.0
      %559 = vmatpush1.msra.mxu0 0.0
      %560 = vmatprep.subr.mxu0 0.0
      %561 = vmatpush1.msra.mxu0 0.0
      %562 = vmatprep.subr.mxu0 0.0
      %563 = vmatpush1.msra.mxu0 0.0
      %564 = vmatprep.subr.mxu0 0.0
      %565 = vmatpush1.msra.mxu0 0.0
      %566 = vmatprep.subr.mxu0 0.0
      %567 = vmatpush1.msra.mxu0 0.0
      %568 = vmatprep.subr.mxu0 0.0
      %569 = vmatpush1.msra.mxu0 0.0
      %570 = vmatprep.subr.mxu0 0.0
      %571 = vmatpush1.msra.mxu0 0.0
      %572 = vmatprep.subr.mxu0 0.0
      %v573 = vand.u32 %v215, 4294901760
      %v574 = vsub.f32 %v215, %v573
      %v575 = vand.u32 %v574, 4294901760
      %576 = vmatpush1.msra.mxu0 %v575
      %577 = vmatprep.subr.mxu0 0.0
      %v578 = vand.u32 %v214, 4294901760
      %v579 = vsub.f32 %v214, %v578
      %v580 = vand.u32 %v579, 4294901760
      %581 = vmatpush1.msra.mxu0 %v580
      %582 = vmatprep.subr.mxu0 0.0
      %v583 = vand.u32 %v213, 4294901760
      %v584 = vsub.f32 %v213, %v583
      %v585 = vand.u32 %v584, 4294901760
      %586 = vmatpush1.msra.mxu0 %v585
      %587 = vmatprep.subr.mxu0 0.0
      %v588 = vand.u32 %v212, 4294901760
      %v589 = vsub.f32 %v212, %v588
      %v590 = vand.u32 %v589, 4294901760
      %591 = vmatpush1.msra.mxu0 %v590
      %592 = vmatprep.subr.mxu0 0.0
      %593 = vmatpush2.msra.mxu0 0.0
      %594 = vmatprep.subr.mxu0 0.0
      %595 = vmatpush2.msra.mxu0 0.0
      %596 = vmatprep.subr.mxu0 0.0
      %597 = vmatpush2.msra.mxu0 0.0
      %598 = vmatprep.subr.mxu0 0.0
      %599 = vmatpush2.msra.mxu0 0.0
      %600 = vmatprep.subr.mxu0 0.0
      %601 = vmatpush2.msra.mxu0 0.0
      %602 = vmatprep.subr.mxu0 0.0
      %603 = vmatpush2.msra.mxu0 0.0
      %604 = vmatprep.subr.mxu0 0.0
      %605 = vmatpush2.msra.mxu0 0.0
      %606 = vmatprep.subr.mxu0 0.0
      %607 = vmatpush2.msra.mxu0 0.0
      %608 = vmatprep.subr.mxu0 0.0
      %609 = vmatpush2.msra.mxu0 0.0
      %610 = vmatprep.subr.mxu0 0.0
      %611 = vmatpush2.msra.mxu0 0.0
      %612 = vmatprep.subr.mxu0 0.0
      %613 = vmatpush2.msra.mxu0 0.0
      %614 = vmatprep.subr.mxu0 0.0
      %615 = vmatpush2.msra.mxu0 0.0
      %616 = vmatprep.subr.mxu0 0.0
      %617 = vmatpush2.msra.mxu0 0.0
      %618 = vmatprep.subr.mxu0 0.0
      %619 = vmatpush2.msra.mxu0 0.0
      %620 = vmatprep.subr.mxu0 0.0
      %621 = vmatpush2.msra.mxu0 0.0
      %622 = vmatprep.subr.mxu0 0.0
      %623 = vmatpush2.msra.mxu0 0.0
      %624 = vmatprep.mubr.f32.mxu0 0.0
      %v625 = vand.u32 %v219, 4294901760
      %626 = vmatmul.mubr.f32.gmra.mxu0 %v625
      %v627 = vpop.f32.mrf.mxu0
      %v628 = vadd.f32 %v545, %v627
      %v629 = vpop.f32.mrf.mxu0
      %630 = vdwg.mxu0
      %631 = vmatprep.subr.mxu0 0.0
      %632 = vmatpush1.msra.mxu0 0.0
      %633 = vmatprep.subr.mxu0 0.0
      %634 = vmatpush1.msra.mxu0 0.0
      %635 = vmatprep.subr.mxu0 0.0
      %636 = vmatpush1.msra.mxu0 0.0
      %637 = vmatprep.subr.mxu0 0.0
      %638 = vmatpush1.msra.mxu0 0.0
      %639 = vmatprep.subr.mxu0 0.0
      %640 = vmatpush1.msra.mxu0 0.0
      %641 = vmatprep.subr.mxu0 0.0
      %642 = vmatpush1.msra.mxu0 0.0
      %643 = vmatprep.subr.mxu0 0.0
      %644 = vmatpush1.msra.mxu0 0.0
      %645 = vmatprep.subr.mxu0 0.0
      %646 = vmatpush1.msra.mxu0 0.0
      %647 = vmatprep.subr.mxu0 0.0
      %648 = vmatpush1.msra.mxu0 0.0
      %649 = vmatprep.subr.mxu0 0.0
      %650 = vmatpush1.msra.mxu0 0.0
      %651 = vmatprep.subr.mxu0 0.0
      %652 = vmatpush1.msra.mxu0 0.0
      %653 = vmatprep.subr.mxu0 0.0
      %654 = vmatpush1.msra.mxu0 0.0
      %655 = vmatprep.subr.mxu0 0.0
      %v656 = vand.u32 %v215, 4294901760
      %657 = vmatpush1.msra.mxu0 %v656
      %658 = vmatprep.subr.mxu0 0.0
      %v659 = vand.u32 %v214, 4294901760
      %660 = vmatpush1.msra.mxu0 %v659
      %661 = vmatprep.subr.mxu0 0.0
      %v662 = vand.u32 %v213, 4294901760
      %663 = vmatpush1.msra.mxu0 %v662
      %664 = vmatprep.subr.mxu0 0.0
      %v665 = vand.u32 %v212, 4294901760
      %666 = vmatpush1.msra.mxu0 %v665
      %667 = vmatprep.subr.mxu0 0.0
      %668 = vmatpush2.msra.mxu0 0.0
      %669 = vmatprep.subr.mxu0 0.0
      %670 = vmatpush2.msra.mxu0 0.0
      %671 = vmatprep.subr.mxu0 0.0
      %672 = vmatpush2.msra.mxu0 0.0
      %673 = vmatprep.subr.mxu0 0.0
      %674 = vmatpush2.msra.mxu0 0.0
      %675 = vmatprep.subr.mxu0 0.0
      %676 = vmatpush2.msra.mxu0 0.0
      %677 = vmatprep.subr.mxu0 0.0
      %678 = vmatpush2.msra.mxu0 0.0
      %679 = vmatprep.subr.mxu0 0.0
      %680 = vmatpush2.msra.mxu0 0.0
      %681 = vmatprep.subr.mxu0 0.0
      %682 = vmatpush2.msra.mxu0 0.0
      %683 = vmatprep.subr.mxu0 0.0
      %684 = vmatpush2.msra.mxu0 0.0
      %685 = vmatprep.subr.mxu0 0.0
      %686 = vmatpush2.msra.mxu0 0.0
      %687 = vmatprep.subr.mxu0 0.0
      %688 = vmatpush2.msra.mxu0 0.0
      %689 = vmatprep.subr.mxu0 0.0
      %690 = vmatpush2.msra.mxu0 0.0
      %691 = vmatprep.subr.mxu0 0.0
      %692 = vmatpush2.msra.mxu0 0.0
      %693 = vmatprep.subr.mxu0 0.0
      %694 = vmatpush2.msra.mxu0 0.0
      %695 = vmatprep.subr.mxu0 0.0
      %696 = vmatpush2.msra.mxu0 0.0
      %697 = vmatprep.subr.mxu0 0.0
      %698 = vmatpush2.msra.mxu0 0.0
      %699 = vmatprep.mubr.f32.mxu0 0.0
      %v700 = vand.u32 %v219, 4294901760
      %701 = vmatmul.mubr.f32.gmra.mxu0 %v700
      %v702 = vpop.f32.mrf.mxu0
      %v703 = vadd.f32 %v628, %v702
      %v704 = vpop.f32.mrf.mxu0
      %705 = vdwg.mxu0
      %v706 = vmax.f32 %v703, 0.0
      %v707 = vld [vmem:[%s2] sm:$0xff]
      %v708 = vld [vmem:[%s2 + $0x8] sm:$0xff]
      %v709 = vld [vmem:[%s2 + $0x10] sm:$0xff]
      %v710 = vld [vmem:[%s2 + $0x18] sm:$0xff]
      %vm711 = vcmask 15360
      %v713 = vsel %vm711, %v707, 0
      %v716 = vsel %vm711, %v708, 0
      %v719 = vsel %vm711, %v709, 0
      %v722 = vsel %vm711, %v710, 0
      %vm724 = vcmask 1041408
      %v726 = vsel %vm724, %v706, 0
      %728 = vmatprep.subr.mxu0 0.0
      %729 = vmatpush1.msra.mxu0 0.0
      %730 = vmatprep.subr.mxu0 0.0
      %731 = vmatpush1.msra.mxu0 0.0
      %732 = vmatprep.subr.mxu0 0.0
      %733 = vmatpush1.msra.mxu0 0.0
      %734 = vmatprep.subr.mxu0 0.0
      %735 = vmatpush1.msra.mxu0 0.0
      %736 = vmatprep.subr.mxu0 0.0
      %737 = vmatpush1.msra.mxu0 0.0
      %738 = vmatprep.subr.mxu0 0.0
      %739 = vmatpush1.msra.mxu0 0.0
      %740 = vmatprep.subr.mxu0 0.0
      %741 = vmatpush1.msra.mxu0 0.0
      %742 = vmatprep.subr.mxu0 0.0
      %743 = vmatpush1.msra.mxu0 0.0
      %744 = vmatprep.subr.mxu0 0.0
      %745 = vmatpush1.msra.mxu0 0.0
      %746 = vmatprep.subr.mxu0 0.0
      %747 = vmatpush1.msra.mxu0 0.0
      %748 = vmatprep.subr.mxu0 0.0
      %749 = vmatpush1.msra.mxu0 0.0
      %750 = vmatprep.subr.mxu0 0.0
      %751 = vmatpush1.msra.mxu0 0.0
      %752 = vmatprep.subr.mxu0 0.0
      %753 = vmatpush1.msra.mxu0 0.0
      %754 = vmatprep.subr.mxu0 0.0
      %755 = vmatpush1.msra.mxu0 0.0
      %756 = vmatprep.subr.mxu0 0.0
      %757 = vmatpush1.msra.mxu0 0.0
      %758 = vmatprep.subr.mxu0 0.0
      %v759 = vand.u32 %v726, 4294901760
      %760 = vmatpush1.msra.mxu0 %v759
      %761 = vmatprep.subr.mxu0 0.0
      %762 = vmatpush2.msra.mxu0 0.0
      %763 = vmatprep.subr.mxu0 0.0
      %764 = vmatpush2.msra.mxu0 0.0
      %765 = vmatprep.subr.mxu0 0.0
      %766 = vmatpush2.msra.mxu0 0.0
      %767 = vmatprep.subr.mxu0 0.0
      %768 = vmatpush2.msra.mxu0 0.0
      %769 = vmatprep.subr.mxu0 0.0
      %770 = vmatpush2.msra.mxu0 0.0
      %771 = vmatprep.subr.mxu0 0.0
      %772 = vmatpush2.msra.mxu0 0.0
      %773 = vmatprep.subr.mxu0 0.0
      %774 = vmatpush2.msra.mxu0 0.0
      %775 = vmatprep.subr.mxu0 0.0
      %776 = vmatpush2.msra.mxu0 0.0
      %777 = vmatprep.subr.mxu0 0.0
      %778 = vmatpush2.msra.mxu0 0.0
      %779 = vmatprep.subr.mxu0 0.0
      %780 = vmatpush2.msra.mxu0 0.0
      %781 = vmatprep.subr.mxu0 0.0
      %782 = vmatpush2.msra.mxu0 0.0
      %783 = vmatprep.subr.mxu0 0.0
      %784 = vmatpush2.msra.mxu0 0.0
      %785 = vmatprep.subr.mxu0 0.0
      %786 = vmatpush2.msra.mxu0 0.0
      %787 = vmatprep.subr.mxu0 0.0
      %788 = vmatpush2.msra.mxu0 0.0
      %789 = vmatprep.subr.mxu0 0.0
      %790 = vmatpush2.msra.mxu0 0.0
      %791 = vmatprep.subr.mxu0 0.0
      %792 = vmatpush2.msra.mxu0 0.0
      %793 = vmatprep.mubr.f32.mxu0 0.0
      %v794 = vand.u32 %v713, 4294901760
      %v795 = vsub.f32 %v713, %v794
      %v796 = vand.u32 %v795, 4294901760
      %v797 = vsub.f32 %v795, %v796
      %v798 = vand.u32 %v797, 4294901760
      %799 = vmatmul.mubr.f32.gmra.mxu0 %v798
      %v800 = vpop.f32.mrf.mxu0
      %v801 = vadd.f32 0.0, %v800
      %v802 = vpop.f32.mrf.mxu0
      %803 = vmatprep.mubr.f32.mxu0 0.0
      %v804 = vand.u32 %v716, 4294901760
      %v805 = vsub.f32 %v716, %v804
      %v806 = vand.u32 %v805, 4294901760
      %v807 = vsub.f32 %v805, %v806
      %v808 = vand.u32 %v807, 4294901760
      %809 = vmatmul.mubr.f32.gmra.mxu0 %v808
      %v810 = vpop.f32.mrf.mxu0
      %v811 = vadd.f32 0.0, %v810
      %v812 = vpop.f32.mrf.mxu0
      %813 = vmatprep.mubr.f32.mxu0 0.0
      %v814 = vand.u32 %v719, 4294901760
      %v815 = vsub.f32 %v719, %v814
      %v816 = vand.u32 %v815, 4294901760
      %v817 = vsub.f32 %v815, %v816
      %v818 = vand.u32 %v817, 4294901760
      %819 = vmatmul.mubr.f32.gmra.mxu0 %v818
      %v820 = vpop.f32.mrf.mxu0
      %v821 = vadd.f32 0.0, %v820
      %v822 = vpop.f32.mrf.mxu0
      %823 = vmatprep.mubr.f32.mxu0 0.0
      %v824 = vand.u32 %v722, 4294901760
      %v825 = vsub.f32 %v722, %v824
      %v826 = vand.u32 %v825, 4294901760
      %v827 = vsub.f32 %v825, %v826
      %v828 = vand.u32 %v827, 4294901760
      %829 = vmatmul.mubr.f32.gmra.mxu0 %v828
      %v830 = vpop.f32.mrf.mxu0
      %v831 = vadd.f32 0.0, %v830
      %v832 = vpop.f32.mrf.mxu0
      %833 = vdwg.mxu0
      %834 = vmatprep.subr.mxu0 0.0
      %835 = vmatpush1.msra.mxu0 0.0
      %836 = vmatprep.subr.mxu0 0.0
      %837 = vmatpush1.msra.mxu0 0.0
      %838 = vmatprep.subr.mxu0 0.0
      %839 = vmatpush1.msra.mxu0 0.0
      %840 = vmatprep.subr.mxu0 0.0
      %841 = vmatpush1.msra.mxu0 0.0
      %842 = vmatprep.subr.mxu0 0.0
      %843 = vmatpush1.msra.mxu0 0.0
      %844 = vmatprep.subr.mxu0 0.0
      %845 = vmatpush1.msra.mxu0 0.0
      %846 = vmatprep.subr.mxu0 0.0
      %847 = vmatpush1.msra.mxu0 0.0
      %848 = vmatprep.subr.mxu0 0.0
      %849 = vmatpush1.msra.mxu0 0.0
      %850 = vmatprep.subr.mxu0 0.0
      %851 = vmatpush1.msra.mxu0 0.0
      %852 = vmatprep.subr.mxu0 0.0
      %853 = vmatpush1.msra.mxu0 0.0
      %854 = vmatprep.subr.mxu0 0.0
      %855 = vmatpush1.msra.mxu0 0.0
      %856 = vmatprep.subr.mxu0 0.0
      %857 = vmatpush1.msra.mxu0 0.0
      %858 = vmatprep.subr.mxu0 0.0
      %859 = vmatpush1.msra.mxu0 0.0
      %860 = vmatprep.subr.mxu0 0.0
      %861 = vmatpush1.msra.mxu0 0.0
      %862 = vmatprep.subr.mxu0 0.0
      %863 = vmatpush1.msra.mxu0 0.0
      %864 = vmatprep.subr.mxu0 0.0
      %v865 = vand.u32 %v726, 4294901760
      %v866 = vsub.f32 %v726, %v865
      %v867 = vand.u32 %v866, 4294901760
      %v868 = vsub.f32 %v866, %v867
      %v869 = vand.u32 %v868, 4294901760
      %870 = vmatpush1.msra.mxu0 %v869
      %871 = vmatprep.subr.mxu0 0.0
      %872 = vmatpush2.msra.mxu0 0.0
      %873 = vmatprep.subr.mxu0 0.0
      %874 = vmatpush2.msra.mxu0 0.0
      %875 = vmatprep.subr.mxu0 0.0
      %876 = vmatpush2.msra.mxu0 0.0
      %877 = vmatprep.subr.mxu0 0.0
      %878 = vmatpush2.msra.mxu0 0.0
      %879 = vmatprep.subr.mxu0 0.0
      %880 = vmatpush2.msra.mxu0 0.0
      %881 = vmatprep.subr.mxu0 0.0
      %882 = vmatpush2.msra.mxu0 0.0
      %883 = vmatprep.subr.mxu0 0.0
      %884 = vmatpush2.msra.mxu0 0.0
      %885 = vmatprep.subr.mxu0 0.0
      %886 = vmatpush2.msra.mxu0 0.0
      %887 = vmatprep.subr.mxu0 0.0
      %888 = vmatpush2.msra.mxu0 0.0
      %889 = vmatprep.subr.mxu0 0.0
      %890 = vmatpush2.msra.mxu0 0.0
      %891 = vmatprep.subr.mxu0 0.0
      %892 = vmatpush2.msra.mxu0 0.0
      %893 = vmatprep.subr.mxu0 0.0
      %894 = vmatpush2.msra.mxu0 0.0
      %895 = vmatprep.subr.mxu0 0.0
      %896 = vmatpush2.msra.mxu0 0.0
      %897 = vmatprep.subr.mxu0 0.0
      %898 = vmatpush2.msra.mxu0 0.0
      %899 = vmatprep.subr.mxu0 0.0
      %900 = vmatpush2.msra.mxu0 0.0
      %901 = vmatprep.subr.mxu0 0.0
      %902 = vmatpush2.msra.mxu0 0.0
      %903 = vmatprep.mubr.f32.mxu0 0.0
      %v904 = vand.u32 %v713, 4294901760
      %905 = vmatmul.mubr.f32.gmra.mxu0 %v904
      %v906 = vpop.f32.mrf.mxu0
      %v907 = vadd.f32 %v801, %v906
      %v908 = vpop.f32.mrf.mxu0
      %909 = vmatprep.mubr.f32.mxu0 0.0
      %v910 = vand.u32 %v716, 4294901760
      %911 = vmatmul.mubr.f32.gmra.mxu0 %v910
      %v912 = vpop.f32.mrf.mxu0
      %v913 = vadd.f32 %v811, %v912
      %v914 = vpop.f32.mrf.mxu0
      %915 = vmatprep.mubr.f32.mxu0 0.0
      %v916 = vand.u32 %v719, 4294901760
      %917 = vmatmul.mubr.f32.gmra.mxu0 %v916
      %v918 = vpop.f32.mrf.mxu0
      %v919 = vadd.f32 %v821, %v918
      %v920 = vpop.f32.mrf.mxu0
      %921 = vmatprep.mubr.f32.mxu0 0.0
      %v922 = vand.u32 %v722, 4294901760
      %923 = vmatmul.mubr.f32.gmra.mxu0 %v922
      %v924 = vpop.f32.mrf.mxu0
      %v925 = vadd.f32 %v831, %v924
      %v926 = vpop.f32.mrf.mxu0
      %927 = vdwg.mxu0
      %928 = vmatprep.subr.mxu0 0.0
      %929 = vmatpush1.msra.mxu0 0.0
      %930 = vmatprep.subr.mxu0 0.0
      %931 = vmatpush1.msra.mxu0 0.0
      %932 = vmatprep.subr.mxu0 0.0
      %933 = vmatpush1.msra.mxu0 0.0
      %934 = vmatprep.subr.mxu0 0.0
      %935 = vmatpush1.msra.mxu0 0.0
      %936 = vmatprep.subr.mxu0 0.0
      %937 = vmatpush1.msra.mxu0 0.0
      %938 = vmatprep.subr.mxu0 0.0
      %939 = vmatpush1.msra.mxu0 0.0
      %940 = vmatprep.subr.mxu0 0.0
      %941 = vmatpush1.msra.mxu0 0.0
      %942 = vmatprep.subr.mxu0 0.0
      %943 = vmatpush1.msra.mxu0 0.0
      %944 = vmatprep.subr.mxu0 0.0
      %945 = vmatpush1.msra.mxu0 0.0
      %946 = vmatprep.subr.mxu0 0.0
      %947 = vmatpush1.msra.mxu0 0.0
      %948 = vmatprep.subr.mxu0 0.0
      %949 = vmatpush1.msra.mxu0 0.0
      %950 = vmatprep.subr.mxu0 0.0
      %951 = vmatpush1.msra.mxu0 0.0
      %952 = vmatprep.subr.mxu0 0.0
      %953 = vmatpush1.msra.mxu0 0.0
      %954 = vmatprep.subr.mxu0 0.0
      %955 = vmatpush1.msra.mxu0 0.0
      %956 = vmatprep.subr.mxu0 0.0
      %957 = vmatpush1.msra.mxu0 0.0
      %958 = vmatprep.subr.mxu0 0.0
      %v959 = vand.u32 %v726, 4294901760
      %v960 = vsub.f32 %v726, %v959
      %961 = vmatpush1.msra.mxu0 %v960
      %962 = vmatprep.subr.mxu0 0.0
      %963 = vmatpush2.msra.mxu0 0.0
      %964 = vmatprep.subr.mxu0 0.0
      %965 = vmatpush2.msra.mxu0 0.0
      %966 = vmatprep.subr.mxu0 0.0
      %967 = vmatpush2.msra.mxu0 0.0
      %968 = vmatprep.subr.mxu0 0.0
      %969 = vmatpush2.msra.mxu0 0.0
      %970 = vmatprep.subr.mxu0 0.0
      %971 = vmatpush2.msra.mxu0 0.0
      %972 = vmatprep.subr.mxu0 0.0
      %973 = vmatpush2.msra.mxu0 0.0
      %974 = vmatprep.subr.mxu0 0.0
      %975 = vmatpush2.msra.mxu0 0.0
      %976 = vmatprep.subr.mxu0 0.0
      %977 = vmatpush2.msra.mxu0 0.0
      %978 = vmatprep.subr.mxu0 0.0
      %979 = vmatpush2.msra.mxu0 0.0
      %980 = vmatprep.subr.mxu0 0.0
      %981 = vmatpush2.msra.mxu0 0.0
      %982 = vmatprep.subr.mxu0 0.0
      %983 = vmatpush2.msra.mxu0 0.0
      %984 = vmatprep.subr.mxu0 0.0
      %985 = vmatpush2.msra.mxu0 0.0
      %986 = vmatprep.subr.mxu0 0.0
      %987 = vmatpush2.msra.mxu0 0.0
      %988 = vmatprep.subr.mxu0 0.0
      %989 = vmatpush2.msra.mxu0 0.0
      %990 = vmatprep.subr.mxu0 0.0
      %991 = vmatpush2.msra.mxu0 0.0
      %992 = vmatprep.subr.mxu0 0.0
      %993 = vmatpush2.msra.mxu0 0.0
      %994 = vmatprep.mubr.f32.mxu0 0.0
      %v995 = vand.u32 %v713, 4294901760
      %v996 = vsub.f32 %v713, %v995
      %997 = vmatmul.mubr.f32.gmra.mxu0 %v996
      %v998 = vpop.f32.mrf.mxu0
      %v999 = vadd.f32 %v907, %v998
      %v1000 = vpop.f32.mrf.mxu0
      %1001 = vmatprep.mubr.f32.mxu0 0.0
      %v1002 = vand.u32 %v716, 4294901760
      %v1003 = vsub.f32 %v716, %v1002
      %1004 = vmatmul.mubr.f32.gmra.mxu0 %v1003
      %v1005 = vpop.f32.mrf.mxu0
      %v1006 = vadd.f32 %v913, %v1005
      %v1007 = vpop.f32.mrf.mxu0
      %1008 = vmatprep.mubr.f32.mxu0 0.0
      %v1009 = vand.u32 %v719, 4294901760
      %v1010 = vsub.f32 %v719, %v1009
      %1011 = vmatmul.mubr.f32.gmra.mxu0 %v1010
      %v1012 = vpop.f32.mrf.mxu0
      %v1013 = vadd.f32 %v919, %v1012
      %v1014 = vpop.f32.mrf.mxu0
      %1015 = vmatprep.mubr.f32.mxu0 0.0
      %v1016 = vand.u32 %v722, 4294901760
      %v1017 = vsub.f32 %v722, %v1016
      %1018 = vmatmul.mubr.f32.gmra.mxu0 %v1017
      %v1019 = vpop.f32.mrf.mxu0
      %v1020 = vadd.f32 %v925, %v1019
      %v1021 = vpop.f32.mrf.mxu0
      %1022 = vdwg.mxu0
      %1023 = vmatprep.subr.mxu0 0.0
      %1024 = vmatpush1.msra.mxu0 0.0
      %1025 = vmatprep.subr.mxu0 0.0
      %1026 = vmatpush1.msra.mxu0 0.0
      %1027 = vmatprep.subr.mxu0 0.0
      %1028 = vmatpush1.msra.mxu0 0.0
      %1029 = vmatprep.subr.mxu0 0.0
      %1030 = vmatpush1.msra.mxu0 0.0
      %1031 = vmatprep.subr.mxu0 0.0
      %1032 = vmatpush1.msra.mxu0 0.0
      %1033 = vmatprep.subr.mxu0 0.0
      %1034 = vmatpush1.msra.mxu0 0.0
      %1035 = vmatprep.subr.mxu0 0.0
      %1036 = vmatpush1.msra.mxu0 0.0
      %1037 = vmatprep.subr.mxu0 0.0
      %1038 = vmatpush1.msra.mxu0 0.0
      %1039 = vmatprep.subr.mxu0 0.0
      %1040 = vmatpush1.msra.mxu0 0.0
      %1041 = vmatprep.subr.mxu0 0.0
      %1042 = vmatpush1.msra.mxu0 0.0
      %1043 = vmatprep.subr.mxu0 0.0
      %1044 = vmatpush1.msra.mxu0 0.0
      %1045 = vmatprep.subr.mxu0 0.0
      %1046 = vmatpush1.msra.mxu0 0.0
      %1047 = vmatprep.subr.mxu0 0.0
      %1048 = vmatpush1.msra.mxu0 0.0
      %1049 = vmatprep.subr.mxu0 0.0
      %1050 = vmatpush1.msra.mxu0 0.0
      %1051 = vmatprep.subr.mxu0 0.0
      %1052 = vmatpush1.msra.mxu0 0.0
      %1053 = vmatprep.subr.mxu0 0.0
      %v1054 = vand.u32 %v726, 4294901760
      %1055 = vmatpush1.msra.mxu0 %v1054
      %1056 = vmatprep.subr.mxu0 0.0
      %1057 = vmatpush2.msra.mxu0 0.0
      %1058 = vmatprep.subr.mxu0 0.0
      %1059 = vmatpush2.msra.mxu0 0.0
      %1060 = vmatprep.subr.mxu0 0.0
      %1061 = vmatpush2.msra.mxu0 0.0
      %1062 = vmatprep.subr.mxu0 0.0
      %1063 = vmatpush2.msra.mxu0 0.0
      %1064 = vmatprep.subr.mxu0 0.0
      %1065 = vmatpush2.msra.mxu0 0.0
      %1066 = vmatprep.subr.mxu0 0.0
      %1067 = vmatpush2.msra.mxu0 0.0
      %1068 = vmatprep.subr.mxu0 0.0
      %1069 = vmatpush2.msra.mxu0 0.0
      %1070 = vmatprep.subr.mxu0 0.0
      %1071 = vmatpush2.msra.mxu0 0.0
      %1072 = vmatprep.subr.mxu0 0.0
      %1073 = vmatpush2.msra.mxu0 0.0
      %1074 = vmatprep.subr.mxu0 0.0
      %1075 = vmatpush2.msra.mxu0 0.0
      %1076 = vmatprep.subr.mxu0 0.0
      %1077 = vmatpush2.msra.mxu0 0.0
      %1078 = vmatprep.subr.mxu0 0.0
      %1079 = vmatpush2.msra.mxu0 0.0
      %1080 = vmatprep.subr.mxu0 0.0
      %1081 = vmatpush2.msra.mxu0 0.0
      %1082 = vmatprep.subr.mxu0 0.0
      %1083 = vmatpush2.msra.mxu0 0.0
      %1084 = vmatprep.subr.mxu0 0.0
      %1085 = vmatpush2.msra.mxu0 0.0
      %1086 = vmatprep.subr.mxu0 0.0
      %1087 = vmatpush2.msra.mxu0 0.0
      %1088 = vmatprep.mubr.f32.mxu0 0.0
      %v1089 = vand.u32 %v713, 4294901760
      %v1090 = vsub.f32 %v713, %v1089
      %v1091 = vand.u32 %v1090, 4294901760
      %1092 = vmatmul.mubr.f32.gmra.mxu0 %v1091
      %v1093 = vpop.f32.mrf.mxu0
      %v1094 = vadd.f32 %v999, %v1093
      %v1095 = vpop.f32.mrf.mxu0
      %1096 = vmatprep.mubr.f32.mxu0 0.0
      %v1097 = vand.u32 %v716, 4294901760
      %v1098 = vsub.f32 %v716, %v1097
      %v1099 = vand.u32 %v1098, 4294901760
      %1100 = vmatmul.mubr.f32.gmra.mxu0 %v1099
      %v1101 = vpop.f32.mrf.mxu0
      %v1102 = vadd.f32 %v1006, %v1101
      %v1103 = vpop.f32.mrf.mxu0
      %1104 = vmatprep.mubr.f32.mxu0 0.0
      %v1105 = vand.u32 %v719, 4294901760
      %v1106 = vsub.f32 %v719, %v1105
      %v1107 = vand.u32 %v1106, 4294901760
      %1108 = vmatmul.mubr.f32.gmra.mxu0 %v1107
      %v1109 = vpop.f32.mrf.mxu0
      %v1110 = vadd.f32 %v1013, %v1109
      %v1111 = vpop.f32.mrf.mxu0
      %1112 = vmatprep.mubr.f32.mxu0 0.0
      %v1113 = vand.u32 %v722, 4294901760
      %v1114 = vsub.f32 %v722, %v1113
      %v1115 = vand.u32 %v1114, 4294901760
      %1116 = vmatmul.mubr.f32.gmra.mxu0 %v1115
      %v1117 = vpop.f32.mrf.mxu0
      %v1118 = vadd.f32 %v1020, %v1117
      %v1119 = vpop.f32.mrf.mxu0
      %1120 = vdwg.mxu0
      %1121 = vmatprep.subr.mxu0 0.0
      %1122 = vmatpush1.msra.mxu0 0.0
      %1123 = vmatprep.subr.mxu0 0.0
      %1124 = vmatpush1.msra.mxu0 0.0
      %1125 = vmatprep.subr.mxu0 0.0
      %1126 = vmatpush1.msra.mxu0 0.0
      %1127 = vmatprep.subr.mxu0 0.0
      %1128 = vmatpush1.msra.mxu0 0.0
      %1129 = vmatprep.subr.mxu0 0.0
      %1130 = vmatpush1.msra.mxu0 0.0
      %1131 = vmatprep.subr.mxu0 0.0
      %1132 = vmatpush1.msra.mxu0 0.0
      %1133 = vmatprep.subr.mxu0 0.0
      %1134 = vmatpush1.msra.mxu0 0.0
      %1135 = vmatprep.subr.mxu0 0.0
      %1136 = vmatpush1.msra.mxu0 0.0
      %1137 = vmatprep.subr.mxu0 0.0
      %1138 = vmatpush1.msra.mxu0 0.0
      %1139 = vmatprep.subr.mxu0 0.0
      %1140 = vmatpush1.msra.mxu0 0.0
      %1141 = vmatprep.subr.mxu0 0.0
      %1142 = vmatpush1.msra.mxu0 0.0
      %1143 = vmatprep.subr.mxu0 0.0
      %1144 = vmatpush1.msra.mxu0 0.0
      %1145 = vmatprep.subr.mxu0 0.0
      %1146 = vmatpush1.msra.mxu0 0.0
      %1147 = vmatprep.subr.mxu0 0.0
      %1148 = vmatpush1.msra.mxu0 0.0
      %1149 = vmatprep.subr.mxu0 0.0
      %1150 = vmatpush1.msra.mxu0 0.0
      %1151 = vmatprep.subr.mxu0 0.0
      %v1152 = vand.u32 %v726, 4294901760
      %v1153 = vsub.f32 %v726, %v1152
      %v1154 = vand.u32 %v1153, 4294901760
      %1155 = vmatpush1.msra.mxu0 %v1154
      %1156 = vmatprep.subr.mxu0 0.0
      %1157 = vmatpush2.msra.mxu0 0.0
      %1158 = vmatprep.subr.mxu0 0.0
      %1159 = vmatpush2.msra.mxu0 0.0
      %1160 = vmatprep.subr.mxu0 0.0
      %1161 = vmatpush2.msra.mxu0 0.0
      %1162 = vmatprep.subr.mxu0 0.0
      %1163 = vmatpush2.msra.mxu0 0.0
      %1164 = vmatprep.subr.mxu0 0.0
      %1165 = vmatpush2.msra.mxu0 0.0
      %1166 = vmatprep.subr.mxu0 0.0
      %1167 = vmatpush2.msra.mxu0 0.0
      %1168 = vmatprep.subr.mxu0 0.0
      %1169 = vmatpush2.msra.mxu0 0.0
      %1170 = vmatprep.subr.mxu0 0.0
      %1171 = vmatpush2.msra.mxu0 0.0
      %1172 = vmatprep.subr.mxu0 0.0
      %1173 = vmatpush2.msra.mxu0 0.0
      %1174 = vmatprep.subr.mxu0 0.0
      %1175 = vmatpush2.msra.mxu0 0.0
      %1176 = vmatprep.subr.mxu0 0.0
      %1177 = vmatpush2.msra.mxu0 0.0
      %1178 = vmatprep.subr.mxu0 0.0
      %1179 = vmatpush2.msra.mxu0 0.0
      %1180 = vmatprep.subr.mxu0 0.0
      %1181 = vmatpush2.msra.mxu0 0.0
      %1182 = vmatprep.subr.mxu0 0.0
      %1183 = vmatpush2.msra.mxu0 0.0
      %1184 = vmatprep.subr.mxu0 0.0
      %1185 = vmatpush2.msra.mxu0 0.0
      %1186 = vmatprep.subr.mxu0 0.0
      %1187 = vmatpush2.msra.mxu0 0.0
      %1188 = vmatprep.mubr.f32.mxu0 0.0
      %v1189 = vand.u32 %v713, 4294901760
      %1190 = vmatmul.mubr.f32.gmra.mxu0 %v1189
      %v1191 = vpop.f32.mrf.mxu0
      %v1192 = vadd.f32 %v1094, %v1191
      %v1193 = vpop.f32.mrf.mxu0
      %1194 = vmatprep.mubr.f32.mxu0 0.0
      %v1195 = vand.u32 %v716, 4294901760
      %1196 = vmatmul.mubr.f32.gmra.mxu0 %v1195
      %v1197 = vpop.f32.mrf.mxu0
      %v1198 = vadd.f32 %v1102, %v1197
      %v1199 = vpop.f32.mrf.mxu0
      %1200 = vmatprep.mubr.f32.mxu0 0.0
      %v1201 = vand.u32 %v719, 4294901760
      %1202 = vmatmul.mubr.f32.gmra.mxu0 %v1201
      %v1203 = vpop.f32.mrf.mxu0
      %v1204 = vadd.f32 %v1110, %v1203
      %v1205 = vpop.f32.mrf.mxu0
      %1206 = vmatprep.mubr.f32.mxu0 0.0
      %v1207 = vand.u32 %v722, 4294901760
      %1208 = vmatmul.mubr.f32.gmra.mxu0 %v1207
      %v1209 = vpop.f32.mrf.mxu0
      %v1210 = vadd.f32 %v1118, %v1209
      %v1211 = vpop.f32.mrf.mxu0
      %1212 = vdwg.mxu0
      %1213 = vmatprep.subr.mxu0 0.0
      %1214 = vmatpush1.msra.mxu0 0.0
      %1215 = vmatprep.subr.mxu0 0.0
      %1216 = vmatpush1.msra.mxu0 0.0
      %1217 = vmatprep.subr.mxu0 0.0
      %1218 = vmatpush1.msra.mxu0 0.0
      %1219 = vmatprep.subr.mxu0 0.0
      %1220 = vmatpush1.msra.mxu0 0.0
      %1221 = vmatprep.subr.mxu0 0.0
      %1222 = vmatpush1.msra.mxu0 0.0
      %1223 = vmatprep.subr.mxu0 0.0
      %1224 = vmatpush1.msra.mxu0 0.0
      %1225 = vmatprep.subr.mxu0 0.0
      %1226 = vmatpush1.msra.mxu0 0.0
      %1227 = vmatprep.subr.mxu0 0.0
      %1228 = vmatpush1.msra.mxu0 0.0
      %1229 = vmatprep.subr.mxu0 0.0
      %1230 = vmatpush1.msra.mxu0 0.0
      %1231 = vmatprep.subr.mxu0 0.0
      %1232 = vmatpush1.msra.mxu0 0.0
      %1233 = vmatprep.subr.mxu0 0.0
      %1234 = vmatpush1.msra.mxu0 0.0
      %1235 = vmatprep.subr.mxu0 0.0
      %1236 = vmatpush1.msra.mxu0 0.0
      %1237 = vmatprep.subr.mxu0 0.0
      %1238 = vmatpush1.msra.mxu0 0.0
      %1239 = vmatprep.subr.mxu0 0.0
      %1240 = vmatpush1.msra.mxu0 0.0
      %1241 = vmatprep.subr.mxu0 0.0
      %1242 = vmatpush1.msra.mxu0 0.0
      %1243 = vmatprep.subr.mxu0 0.0
      %v1244 = vand.u32 %v726, 4294901760
      %1245 = vmatpush1.msra.mxu0 %v1244
      %1246 = vmatprep.subr.mxu0 0.0
      %1247 = vmatpush2.msra.mxu0 0.0
      %1248 = vmatprep.subr.mxu0 0.0
      %1249 = vmatpush2.msra.mxu0 0.0
      %1250 = vmatprep.subr.mxu0 0.0
      %1251 = vmatpush2.msra.mxu0 0.0
      %1252 = vmatprep.subr.mxu0 0.0
      %1253 = vmatpush2.msra.mxu0 0.0
      %1254 = vmatprep.subr.mxu0 0.0
      %1255 = vmatpush2.msra.mxu0 0.0
      %1256 = vmatprep.subr.mxu0 0.0
      %1257 = vmatpush2.msra.mxu0 0.0
      %1258 = vmatprep.subr.mxu0 0.0
      %1259 = vmatpush2.msra.mxu0 0.0
      %1260 = vmatprep.subr.mxu0 0.0
      %1261 = vmatpush2.msra.mxu0 0.0
      %1262 = vmatprep.subr.mxu0 0.0
      %1263 = vmatpush2.msra.mxu0 0.0
      %1264 = vmatprep.subr.mxu0 0.0
      %1265 = vmatpush2.msra.mxu0 0.0
      %1266 = vmatprep.subr.mxu0 0.0
      %1267 = vmatpush2.msra.mxu0 0.0
      %1268 = vmatprep.subr.mxu0 0.0
      %1269 = vmatpush2.msra.mxu0 0.0
      %1270 = vmatprep.subr.mxu0 0.0
      %1271 = vmatpush2.msra.mxu0 0.0
      %1272 = vmatprep.subr.mxu0 0.0
      %1273 = vmatpush2.msra.mxu0 0.0
      %1274 = vmatprep.subr.mxu0 0.0
      %1275 = vmatpush2.msra.mxu0 0.0
      %1276 = vmatprep.subr.mxu0 0.0
      %1277 = vmatpush2.msra.mxu0 0.0
      %1278 = vmatprep.mubr.f32.mxu0 0.0
      %v1279 = vand.u32 %v713, 4294901760
      %1280 = vmatmul.mubr.f32.gmra.mxu0 %v1279
      %v1281 = vpop.f32.mrf.mxu0
      %v1282 = vadd.f32 %v1192, %v1281
      %v1283 = vpop.f32.mrf.mxu0
      %1284 = vmatprep.mubr.f32.mxu0 0.0
      %v1285 = vand.u32 %v716, 4294901760
      %1286 = vmatmul.mubr.f32.gmra.mxu0 %v1285
      %v1287 = vpop.f32.mrf.mxu0
      %v1288 = vadd.f32 %v1198, %v1287
      %v1289 = vpop.f32.mrf.mxu0
      %1290 = vmatprep.mubr.f32.mxu0 0.0
      %v1291 = vand.u32 %v719, 4294901760
      %1292 = vmatmul.mubr.f32.gmra.mxu0 %v1291
      %v1293 = vpop.f32.mrf.mxu0
      %v1294 = vadd.f32 %v1204, %v1293
      %v1295 = vpop.f32.mrf.mxu0
      %1296 = vmatprep.mubr.f32.mxu0 0.0
      %v1297 = vand.u32 %v722, 4294901760
      %1298 = vmatmul.mubr.f32.gmra.mxu0 %v1297
      %v1299 = vpop.f32.mrf.mxu0
      %v1300 = vadd.f32 %v1210, %v1299
      %v1301 = vpop.f32.mrf.mxu0
      %1302 = vdwg.mxu0
      %v1303 = vsel %vm711, %v1282, 0.0
      %1304 = vadd.xlane.f32.xlu0 %v1303
      %v1305 = vpop.xlane.xlu0 %1304
      %v1306 = vsel %vm711, %v1288, 0.0
      %1307 = vadd.xlane.f32.xlu0 %v1306
      %v1308 = vpop.xlane.xlu0 %1307
      %v1309 = vsel %vm711, %v1294, 0.0
      %1310 = vadd.xlane.f32.xlu0 %v1309
      %v1311 = vpop.xlane.xlu0 %1310
      %v1312 = vsel %vm711, %v1300, 0.0
      %1313 = vadd.xlane.f32.xlu0 %v1312
      %v1314 = vpop.xlane.xlu0 %1313
      %v1315 = vxor.u32 %v1305, 2147483648
      %v1316 = vxor.u32 %v1308, 2147483648
      %v1317 = vxor.u32 %v1311, 2147483648
      %v1318 = vxor.u32 %v1314, 2147483648
      %v1319 = vmul.f32 %v1315, 1.442695
      %v1320 = vpow.pop %v1319
      %v1321 = vmul.f32 %v1316, 1.442695
      %v1322 = vpow.pop %v1321
      %v1323 = vmul.f32 %v1317, 1.442695
      %v1324 = vpow.pop %v1323
      %v1325 = vmul.f32 %v1318, 1.442695
      %v1326 = vpow.pop %v1325
      %v1327 = vadd.f32 %v1320, 1.0
      %v1328 = vadd.f32 %v1322, 1.0
      %v1329 = vadd.f32 %v1324, 1.0
      %v1330 = vadd.f32 %v1326, 1.0
      %v1331 = vrcp.pop %v1327
      %v1332 = vmul.f32 1.0, %v1331
      %v1333 = vrcp.pop %v1328
      %v1334 = vmul.f32 1.0, %v1333
      %v1335 = vrcp.pop %v1329
      %v1336 = vmul.f32 1.0, %v1335
      %v1337 = vrcp.pop %v1330
      %v1338 = vmul.f32 1.0, %v1337
      %v1339 = vadd.f32 %v1332, 1.0
      %v1340 = vadd.f32 %v1334, 1.0
      %v1341 = vadd.f32 %v1336, 1.0
      %v1342 = vadd.f32 %v1338, 1.0
      %v1343 = vmul.f32 %v1339, %v171
      %v1344 = vmul.f32 %v1339, %v172
      %v1345 = vmul.f32 %v1340, %v173
      %v1346 = vmul.f32 %v1340, %v174
      %v1347 = vmul.f32 %v1341, %v175
      %v1348 = vmul.f32 %v1341, %v176
      %v1349 = vmul.f32 %v1342, %v177
      %v1350 = vmul.f32 %v1342, %v178
      %1351 = vst [vmem:[%s170] sm:$0xff] %v1343
      %1352 = vst [vmem:[%s170 + $0x8] sm:$0xff] %v1344
      %1353 = vst [vmem:[%s170 + $0x10] sm:$0xff] %v1345
      %1354 = vst [vmem:[%s170 + $0x18] sm:$0xff] %v1346
      %1355 = vst [vmem:[%s170 + $0x20] sm:$0xff] %v1347
      %1356 = vst [vmem:[%s170 + $0x28] sm:$0xff] %v1348
      %1357 = vst [vmem:[%s170 + $0x30] sm:$0xff] %v1349
      %1358 = vst [vmem:[%s170 + $0x38] sm:$0xff] %v1350
      %p1359 = scmp.lt.s32.totalorder %s14, 1
      %s1360 = scalar_select %p1359, %s14, 1
      %s1361 = smul.addr %s1360, 8
      %s1362 = smul.addr %s1361, 8
      %s1363 = scalar_lea.vmem %s3, %s1362
      // Predicated region
      $region33: #{_fused_forward_impl.1} parent=31 // pred_check
        %p1364 = pneg %p100
      $region34: #{_fused_forward_impl.1} parent=31 // pred_check_branch
        %1366 = sbr.rel (%p1364) target = $region36
      $region35: #{_fused_forward_impl.1} parent=31 // pred_region
        _
      $region36: #{_fused_forward_impl.1} parent=31 // pred_fallthru
        _
    $region32: #{_fused_forward_impl.1} parent=5 // pred_fallthru
      _
    %p1367 = scmp.le.s32.totalorder 2, %s9
    // Predicated region
    $region37: #{_fused_forward_impl.1} parent=5 // pred_check
      %p1368 = pneg %p1367
    $region38: #{_fused_forward_impl.1} parent=5 // pred_check_branch
      %1370 = sbr.rel (%p1368) target = $region40
    $region39: #{_fused_forward_impl.1} parent=5 // pred_region
      %s1371 = ssub.s32 %s9, 2
      // Predicated region
      $region41: #{_fused_forward_impl.1} parent=39 // pred_check
        %p1372 = pneg %p106
      $region42: #{_fused_forward_impl.1} parent=39 // pred_check_branch
        %1374 = sbr.rel (%p1372) target = $region44
      $region43: #{_fused_forward_impl.1} parent=39 // pred_region
        %p1375 = scmp.lt.s32.totalorder %s15, 1
        %s1376 = scalar_select %p1375, %s15, 1
        %s1377 = smul.addr %s1376, 8
        %s1378 = smul.addr %s1377, 8
        %s1379 = scalar_lea.vmem %s3, %s1378
      $region44: #{_fused_forward_impl.1} parent=39 // pred_fallthru
        _
    $region40: #{_fused_forward_impl.1} parent=5 // pred_fallthru
      _
  $region6: #{_fused_forward_impl.1} parent=0 // loop_footer
    %s13 = sadd.s32 1, %s9
  $region7: #{_fused_forward_impl.1} parent=0 // loop_footer_branch
    %8 = sbr.rel target = $region3
  $region8: #{_fused_forward_impl.1} parent=0 // loop_exit
    _

</llo_original>
